<compile_context>
chip_gen: v6e
topology: v6e:2x2x1
jax: 0.10.0
libtpu: 0.0.40
codegen_flags: <defaults>
</compile_context>

<pallas_src>
import jax
import jax.numpy as jnp
from jax import lax
from jax.experimental import pallas as pl
from jax.experimental.pallas import tpu as pltpu
import numpy as np

RANK = 10
VOCAB = 1000
MASK_TOKEN = 103
EPS = 1e-12
LANE = 128


def tn_kernel(enc_ref, init_ref, w_ref, bias_ref, out_ref, v_ref):
    """enc_ref:  (SB, r, r, TB) VMEM  -- seq-block of cores, batch on lanes
       init_ref: (r, TB)        VMEM  -- G1.weight broadcast over batch lanes
       w_ref:    (r, 1)         VMEM  -- linear.weight as a column
       bias_ref: (1, 1)         VMEM  -- linear.bias
       out_ref:  (1, TB)        VMEM  -- lane-dense logits (batch on lanes)
       v_ref:    (r, TB)        VMEM scratch -- carry, persists across seq blocks
    """
    si = pl.program_id(1)
    sb = enc_ref.shape[0]
    r = enc_ref.shape[1]

    @pl.when(si == 0)
    def _init():
        v_ref[...] = init_ref[...]

    def step(i, v):
        m = enc_ref[i]                         # (r, r, TB)
        acc = v[0:1, :] * m[0]                 # (1,TB)*(r,TB) -> (r,TB), pure VPU
        for j in range(1, r):
            acc = acc + v[j:j + 1, :] * m[j]
        # F.normalize(p=2, dim=1) over a size-1 dim == x / max(|x|, eps):
        # exact VALU select (x/|x| is exactly +-1 whenever |x| >= eps).
        sgn = jnp.where(acc >= 0.0, 1.0, -1.0)
        return jnp.where(jnp.abs(acc) >= EPS, sgn, acc * (1.0 / EPS))

    v = lax.fori_loop(0, sb, step, v_ref[...], unroll=True)
    v_ref[...] = v

    @pl.when(si == pl.num_programs(1) - 1)
    def _readout():
        # out[b] = sum_k v[k, b] * w[k] + bias   (lane-dense, VPU/XLU only)
        out_ref[...] = jnp.sum(v * w_ref[...], axis=0, keepdims=True) + bias_ref[...]


def _pick_sb(seq_len, max_sb=16):
    """Largest divisor of seq_len that is <= max_sb (steps per grid block)."""
    sb = min(seq_len, max_sb)
    while seq_len % sb:
        sb -= 1
    return sb


def tn_forward(x_tokens, g_weight, g1_weight, lin_weight, lin_bias):
    """x_tokens: (B, S) int32; returns (B,) float32 (matches forward().squeeze())."""
    B, S = x_tokens.shape
    r = RANK

    # --- plain-JAX glue: embedding gather staged directly into the kernel
    # layout (S, r, r, B): contraction index j on axis 1, batch on the lane axis.
    enc = g_weight[x_tokens].astype(jnp.float32)                   # (B, S, r*r)
    enc = jnp.transpose(enc.reshape(B, S, r, r), (1, 2, 3, 0))     # (S, r, r, B)

    # Batch tiling: batch on lanes. TB is the lane tile (128 when possible).
    if B >= LANE:
        B_pad = ((B + LANE - 1) // LANE) * LANE
        TB = LANE
    else:
        B_pad = B
        TB = B
    if B_pad > B:
        enc = jnp.pad(enc, ((0, 0), (0, 0), (0, 0), (0, B_pad - B)))
    nb = B_pad // TB

    # Sequence blocking: SB contraction steps per grid iteration (SB | S, so the
    # normalize-every-step semantics are preserved with no seq padding).
    SB = _pick_sb(S)
    ns = S // SB

    init = jnp.broadcast_to(g1_weight.reshape(r, 1), (r, TB)).astype(jnp.float32)
    w_col = lin_weight.reshape(r, 1).astype(jnp.float32)
    bias = lin_bias.reshape(1, 1).astype(jnp.float32)

    out = pl.pallas_call(
        tn_kernel,
        out_shape=jax.ShapeDtypeStruct((1, B_pad), jnp.float32),
        grid_spec=pltpu.PrefetchScalarGridSpec(
            num_scalar_prefetch=0,
            grid=(nb, ns),                                  # (batch, seq blocks)
            in_specs=[
                pl.BlockSpec((SB, r, r, TB), lambda bi, si: (si, 0, 0, bi)),
                pl.BlockSpec((r, TB), lambda bi, si: (0, 0)),
                pl.BlockSpec((r, 1), lambda bi, si: (0, 0)),
                pl.BlockSpec((1, 1), lambda bi, si: (0, 0)),
            ],
            out_specs=pl.BlockSpec((1, TB), lambda bi, si: (0, bi)),
            scratch_shapes=[pltpu.VMEM((r, TB), jnp.float32)],
        ),
        compiler_params=pltpu.CompilerParams(
            dimension_semantics=("parallel", "arbitrary")),
    )(enc, init, w_col, bias)
    return out[0, :B]


def tn_reference(x_tokens, g_weight, g1_weight, lin_weight, lin_bias):
    """Pure-JAX reference mirroring the PyTorch module (no-mask path)."""
    B, S = x_tokens.shape
    r = RANK
    enc = g_weight[x_tokens].reshape(B, S, r, r).astype(jnp.float32)
    v = jnp.broadcast_to(g1_weight.reshape(1, 1, r), (B, 1, r)).astype(jnp.float32)
    for i in range(S):
        v = jnp.einsum('bij,bjk->bik', v, enc[:, i])
        v = v / jnp.maximum(jnp.abs(v), EPS)   # F.normalize(dim=1) on a size-1 dim
    out = jnp.einsum('br,or->bo', v[:, 0, :], lin_weight) + lin_bias
    return out[:, 0]


if __name__ == "__main__":
    key = jax.random.PRNGKey(0)
    kx, kg, kg1, kw, kb = jax.random.split(key, 5)

    B, S = 2, 8
    x = jax.random.randint(kx, (B, S), 0, VOCAB, dtype=jnp.int32)
    x = jnp.where(x == MASK_TOKEN, x + 1, x)  # keep the un-masked path

    # Deterministic parameter init (shapes follow the PyTorch module's __init__).
    g_weight = 0.1 * jax.random.normal(kg, (VOCAB, RANK * RANK), dtype=jnp.float32)
    g1_weight = 0.1 * jax.random.normal(kg1, (RANK, 1), dtype=jnp.float32)   # nn.Linear(1, r).weight
    lin_weight = 0.1 * jax.random.normal(kw, (1, RANK), dtype=jnp.float32)   # nn.Linear(r, 1).weight
    lin_bias = 0.1 * jax.random.normal(kb, (1,), dtype=jnp.float32)          # nn.Linear(r, 1).bias

    out = jax.jit(tn_forward)(x, g_weight, g1_weight, lin_weight, lin_bias)
    out = jax.block_until_ready(out)

    ref = tn_reference(x, g_weight, g1_weight, lin_weight, lin_bias)
    assert out.shape == (B,)
    np.testing.assert_allclose(np.asarray(out), np.asarray(ref), rtol=1e-5, atol=1e-5)
    print("KERNEL_OK")
</pallas_src>

<mosaic_0001>
module attributes {stable_mosaic.version = 11 : i64} {
  func.func @tn_kernel(%arg0: i32, %arg1: i32, %arg2: memref<8x10x10x2xf32, #tpu.memory_space<vmem>>, %arg3: memref<10x2xf32, #tpu.memory_space<vmem>>, %arg4: memref<10x1xf32, #tpu.memory_space<vmem>>, %arg5: memref<1x1xf32, #tpu.memory_space<vmem>>, %arg6: memref<1x2xf32, #tpu.memory_space<vmem>>, %arg7: memref<10x2xf32, #tpu.memory_space<vmem>>) attributes {dimension_semantics = [#tpu.dimension_semantics<parallel>, #tpu.dimension_semantics<arbitrary>], iteration_bounds = array<i64: 1, 1>, scalar_prefetch = 0 : i64, scratch_operands = 1 : i64, tpu.core_type = #tpu.core_type<tc>, window_params = [{transform_indices = @transform_0, window_bounds = array<i64: 8, 10, 10, 2>}, {pipeline_mode = #tpu.pipeline_mode<synchronous>, transform_indices = @transform_1, window_bounds = array<i64: 10, 2>}, {pipeline_mode = #tpu.pipeline_mode<synchronous>, transform_indices = @transform_2, window_bounds = array<i64: 10, 1>}, {pipeline_mode = #tpu.pipeline_mode<synchronous>, transform_indices = @transform_3, window_bounds = array<i64: 1, 1>}, {transform_indices = @transform_4, window_bounds = array<i64: 1, 2>}]} {
    %c0_i32 = arith.constant 0 : i32
    %0 = arith.cmpi eq, %arg1, %c0_i32 : i32
    %1 = arith.extui %0 : i1 to i32
    %c0_i32_0 = arith.constant 0 : i32
    %2 = arith.cmpi ne, %1, %c0_i32_0 : i32
    scf.if %2 {
      %c0_70 = arith.constant 0 : index
      %c0_71 = arith.constant 0 : index
      %592 = vector.load %arg3[%c0_70, %c0_71] : memref<10x2xf32, #tpu.memory_space<vmem>>, vector<10x2xf32>
      %c0_72 = arith.constant 0 : index
      %c0_73 = arith.constant 0 : index
      %593 = vector.load %arg7[%c0_72, %c0_73] : memref<10x2xf32, #tpu.memory_space<vmem>>, vector<10x2xf32>
      tpu.vector_store %arg7[%c0_72, %c0_73], %592 {strides = array<i32>} : memref<10x2xf32, #tpu.memory_space<vmem>>, vector<10x2xf32>,
    } else {
    }
    %c0 = arith.constant 0 : index
    %c0_1 = arith.constant 0 : index
    %3 = vector.load %arg7[%c0, %c0_1] : memref<10x2xf32, #tpu.memory_space<vmem>>, vector<10x2xf32>
    %c0_i32_2 = arith.constant 0 : i32
    %4 = arith.index_cast %c0_i32_2 : i32 to index
    %c0_3 = arith.constant 0 : index
    %c0_4 = arith.constant 0 : index
    %c0_5 = arith.constant 0 : index
    %5 = vector.load %arg2[%4, %c0_3, %c0_4, %c0_5] : memref<8x10x10x2xf32, #tpu.memory_space<vmem>>, vector<1x10x10x2xf32>
    %6 = vector.shape_cast %5 : vector<1x10x10x2xf32> to vector<10x10x2xf32>
    %7 = vector.extract_strided_slice %3 {offsets = [0, 0], sizes = [1, 2], strides = [1, 1]} : vector<10x2xf32> to vector<1x2xf32>
    %8 = vector.extract_strided_slice %6 {offsets = [0, 0, 0], sizes = [1, 10, 2], strides = [1, 1, 1]} : vector<10x10x2xf32> to vector<1x10x2xf32>
    %9 = vector.shape_cast %8 : vector<1x10x2xf32> to vector<10x2xf32>
    %10 = vector.broadcast %7 : vector<1x2xf32> to vector<10x2xf32>
    %11 = arith.mulf %10, %9 : vector<10x2xf32>
    %12 = vector.extract_strided_slice %3 {offsets = [1, 0], sizes = [1, 2], strides = [1, 1]} : vector<10x2xf32> to vector<1x2xf32>
    %13 = vector.extract_strided_slice %6 {offsets = [1, 0, 0], sizes = [1, 10, 2], strides = [1, 1, 1]} : vector<10x10x2xf32> to vector<1x10x2xf32>
    %14 = vector.shape_cast %13 : vector<1x10x2xf32> to vector<10x2xf32>
    %15 = vector.broadcast %12 : vector<1x2xf32> to vector<10x2xf32>
    %16 = arith.mulf %15, %14 : vector<10x2xf32>
    %17 = arith.addf %11, %16 : vector<10x2xf32>
    %18 = vector.extract_strided_slice %3 {offsets = [2, 0], sizes = [1, 2], strides = [1, 1]} : vector<10x2xf32> to vector<1x2xf32>
    %19 = vector.extract_strided_slice %6 {offsets = [2, 0, 0], sizes = [1, 10, 2], strides = [1, 1, 1]} : vector<10x10x2xf32> to vector<1x10x2xf32>
    %20 = vector.shape_cast %19 : vector<1x10x2xf32> to vector<10x2xf32>
    %21 = vector.broadcast %18 : vector<1x2xf32> to vector<10x2xf32>
    %22 = arith.mulf %21, %20 : vector<10x2xf32>
    %23 = arith.addf %17, %22 : vector<10x2xf32>
    %24 = vector.extract_strided_slice %3 {offsets = [3, 0], sizes = [1, 2], strides = [1, 1]} : vector<10x2xf32> to vector<1x2xf32>
    %25 = vector.extract_strided_slice %6 {offsets = [3, 0, 0], sizes = [1, 10, 2], strides = [1, 1, 1]} : vector<10x10x2xf32> to vector<1x10x2xf32>
    %26 = vector.shape_cast %25 : vector<1x10x2xf32> to vector<10x2xf32>
    %27 = vector.broadcast %24 : vector<1x2xf32> to vector<10x2xf32>
    %28 = arith.mulf %27, %26 : vector<10x2xf32>
    %29 = arith.addf %23, %28 : vector<10x2xf32>
    %30 = vector.extract_strided_slice %3 {offsets = [4, 0], sizes = [1, 2], strides = [1, 1]} : vector<10x2xf32> to vector<1x2xf32>
    %31 = vector.extract_strided_slice %6 {offsets = [4, 0, 0], sizes = [1, 10, 2], strides = [1, 1, 1]} : vector<10x10x2xf32> to vector<1x10x2xf32>
    %32 = vector.shape_cast %31 : vector<1x10x2xf32> to vector<10x2xf32>
    %33 = vector.broadcast %30 : vector<1x2xf32> to vector<10x2xf32>
    %34 = arith.mulf %33, %32 : vector<10x2xf32>
    %35 = arith.addf %29, %34 : vector<10x2xf32>
    %36 = vector.extract_strided_slice %3 {offsets = [5, 0], sizes = [1, 2], strides = [1, 1]} : vector<10x2xf32> to vector<1x2xf32>
    %37 = vector.extract_strided_slice %6 {offsets = [5, 0, 0], sizes = [1, 10, 2], strides = [1, 1, 1]} : vector<10x10x2xf32> to vector<1x10x2xf32>
    %38 = vector.shape_cast %37 : vector<1x10x2xf32> to vector<10x2xf32>
    %39 = vector.broadcast %36 : vector<1x2xf32> to vector<10x2xf32>
    %40 = arith.mulf %39, %38 : vector<10x2xf32>
    %41 = arith.addf %35, %40 : vector<10x2xf32>
    %42 = vector.extract_strided_slice %3 {offsets = [6, 0], sizes = [1, 2], strides = [1, 1]} : vector<10x2xf32> to vector<1x2xf32>
    %43 = vector.extract_strided_slice %6 {offsets = [6, 0, 0], sizes = [1, 10, 2], strides = [1, 1, 1]} : vector<10x10x2xf32> to vector<1x10x2xf32>
    %44 = vector.shape_cast %43 : vector<1x10x2xf32> to vector<10x2xf32>
    %45 = vector.broadcast %42 : vector<1x2xf32> to vector<10x2xf32>
    %46 = arith.mulf %45, %44 : vector<10x2xf32>
    %47 = arith.addf %41, %46 : vector<10x2xf32>
    %48 = vector.extract_strided_slice %3 {offsets = [7, 0], sizes = [1, 2], strides = [1, 1]} : vector<10x2xf32> to vector<1x2xf32>
    %49 = vector.extract_strided_slice %6 {offsets = [7, 0, 0], sizes = [1, 10, 2], strides = [1, 1, 1]} : vector<10x10x2xf32> to vector<1x10x2xf32>
    %50 = vector.shape_cast %49 : vector<1x10x2xf32> to vector<10x2xf32>
    %51 = vector.broadcast %48 : vector<1x2xf32> to vector<10x2xf32>
    %52 = arith.mulf %51, %50 : vector<10x2xf32>
    %53 = arith.addf %47, %52 : vector<10x2xf32>
    %54 = vector.extract_strided_slice %3 {offsets = [8, 0], sizes = [1, 2], strides = [1, 1]} : vector<10x2xf32> to vector<1x2xf32>
    %55 = vector.extract_strided_slice %6 {offsets = [8, 0, 0], sizes = [1, 10, 2], strides = [1, 1, 1]} : vector<10x10x2xf32> to vector<1x10x2xf32>
    %56 = vector.shape_cast %55 : vector<1x10x2xf32> to vector<10x2xf32>
    %57 = vector.broadcast %54 : vector<1x2xf32> to vector<10x2xf32>
    %58 = arith.mulf %57, %56 : vector<10x2xf32>
    %59 = arith.addf %53, %58 : vector<10x2xf32>
    %60 = vector.extract_strided_slice %3 {offsets = [9, 0], sizes = [1, 2], strides = [1, 1]} : vector<10x2xf32> to vector<1x2xf32>
    %61 = vector.extract_strided_slice %6 {offsets = [9, 0, 0], sizes = [1, 10, 2], strides = [1, 1, 1]} : vector<10x10x2xf32> to vector<1x10x2xf32>
    %62 = vector.shape_cast %61 : vector<1x10x2xf32> to vector<10x2xf32>
    %63 = vector.broadcast %60 : vector<1x2xf32> to vector<10x2xf32>
    %64 = arith.mulf %63, %62 : vector<10x2xf32>
    %65 = arith.addf %59, %64 : vector<10x2xf32>
    %cst = arith.constant 0.000000e+00 : f32
    %66 = vector.broadcast %cst : f32 to vector<10x2xf32>
    %67 = arith.cmpf oge, %65, %66 : vector<10x2xf32>
    %cst_6 = arith.constant 1.000000e+00 : f32
    %cst_7 = arith.constant -1.000000e+00 : f32
    %68 = vector.broadcast %cst_6 : f32 to vector<10x2xf32>
    %69 = vector.broadcast %cst_7 : f32 to vector<10x2xf32>
    %70 = arith.select %67, %68, %69 : vector<10x2xi1>, vector<10x2xf32>
    %71 = math.absf %65 : vector<10x2xf32>
    %cst_8 = arith.constant 9.99999996E-13 : f32
    %72 = vector.broadcast %cst_8 : f32 to vector<10x2xf32>
    %73 = arith.cmpf oge, %71, %72 : vector<10x2xf32>
    %cst_9 = arith.constant 9.99999995E+11 : f32
    %74 = vector.broadcast %cst_9 : f32 to vector<10x2xf32>
    %75 = arith.mulf %65, %74 : vector<10x2xf32>
    %76 = arith.select %73, %70, %75 : vector<10x2xi1>, vector<10x2xf32>
    %c1_i32 = arith.constant 1 : i32
    %77 = arith.index_cast %c1_i32 : i32 to index
    %c0_10 = arith.constant 0 : index
    %c0_11 = arith.constant 0 : index
    %c0_12 = arith.constant 0 : index
    %78 = vector.load %arg2[%77, %c0_10, %c0_11, %c0_12] : memref<8x10x10x2xf32, #tpu.memory_space<vmem>>, vector<1x10x10x2xf32>
    %79 = vector.shape_cast %78 : vector<1x10x10x2xf32> to vector<10x10x2xf32>
    %80 = vector.extract_strided_slice %76 {offsets = [0, 0], sizes = [1, 2], strides = [1, 1]} : vector<10x2xf32> to vector<1x2xf32>
    %81 = vector.extract_strided_slice %79 {offsets = [0, 0, 0], sizes = [1, 10, 2], strides = [1, 1, 1]} : vector<10x10x2xf32> to vector<1x10x2xf32>
    %82 = vector.shape_cast %81 : vector<1x10x2xf32> to vector<10x2xf32>
    %83 = vector.broadcast %80 : vector<1x2xf32> to vector<10x2xf32>
    %84 = arith.mulf %83, %82 : vector<10x2xf32>
    %85 = vector.extract_strided_slice %76 {offsets = [1, 0], sizes = [1, 2], strides = [1, 1]} : vector<10x2xf32> to vector<1x2xf32>
    %86 = vector.extract_strided_slice %79 {offsets = [1, 0, 0], sizes = [1, 10, 2], strides = [1, 1, 1]} : vector<10x10x2xf32> to vector<1x10x2xf32>
    %87 = vector.shape_cast %86 : vector<1x10x2xf32> to vector<10x2xf32>
    %88 = vector.broadcast %85 : vector<1x2xf32> to vector<10x2xf32>
    %89 = arith.mulf %88, %87 : vector<10x2xf32>
    %90 = arith.addf %84, %89 : vector<10x2xf32>
    %91 = vector.extract_strided_slice %76 {offsets = [2, 0], sizes = [1, 2], strides = [1, 1]} : vector<10x2xf32> to vector<1x2xf32>
    %92 = vector.extract_strided_slice %79 {offsets = [2, 0, 0], sizes = [1, 10, 2], strides = [1, 1, 1]} : vector<10x10x2xf32> to vector<1x10x2xf32>
    %93 = vector.shape_cast %92 : vector<1x10x2xf32> to vector<10x2xf32>
    %94 = vector.broadcast %91 : vector<1x2xf32> to vector<10x2xf32>
    %95 = arith.mulf %94, %93 : vector<10x2xf32>
    %96 = arith.addf %90, %95 : vector<10x2xf32>
    %97 = vector.extract_strided_slice %76 {offsets = [3, 0], sizes = [1, 2], strides = [1, 1]} : vector<10x2xf32> to vector<1x2xf32>
    %98 = vector.extract_strided_slice %79 {offsets = [3, 0, 0], sizes = [1, 10, 2], strides = [1, 1, 1]} : vector<10x10x2xf32> to vector<1x10x2xf32>
    %99 = vector.shape_cast %98 : vector<1x10x2xf32> to vector<10x2xf32>
    %100 = vector.broadcast %97 : vector<1x2xf32> to vector<10x2xf32>
    %101 = arith.mulf %100, %99 : vector<10x2xf32>
    %102 = arith.addf %96, %101 : vector<10x2xf32>
    %103 = vector.extract_strided_slice %76 {offsets = [4, 0], sizes = [1, 2], strides = [1, 1]} : vector<10x2xf32> to vector<1x2xf32>
    %104 = vector.extract_strided_slice %79 {offsets = [4, 0, 0], sizes = [1, 10, 2], strides = [1, 1, 1]} : vector<10x10x2xf32> to vector<1x10x2xf32>
    %105 = vector.shape_cast %104 : vector<1x10x2xf32> to vector<10x2xf32>
    %106 = vector.broadcast %103 : vector<1x2xf32> to vector<10x2xf32>
    %107 = arith.mulf %106, %105 : vector<10x2xf32>
    %108 = arith.addf %102, %107 : vector<10x2xf32>
    %109 = vector.extract_strided_slice %76 {offsets = [5, 0], sizes = [1, 2], strides = [1, 1]} : vector<10x2xf32> to vector<1x2xf32>
    %110 = vector.extract_strided_slice %79 {offsets = [5, 0, 0], sizes = [1, 10, 2], strides = [1, 1, 1]} : vector<10x10x2xf32> to vector<1x10x2xf32>
    %111 = vector.shape_cast %110 : vector<1x10x2xf32> to vector<10x2xf32>
    %112 = vector.broadcast %109 : vector<1x2xf32> to vector<10x2xf32>
    %113 = arith.mulf %112, %111 : vector<10x2xf32>
    %114 = arith.addf %108, %113 : vector<10x2xf32>
    %115 = vector.extract_strided_slice %76 {offsets = [6, 0], sizes = [1, 2], strides = [1, 1]} : vector<10x2xf32> to vector<1x2xf32>
    %116 = vector.extract_strided_slice %79 {offsets = [6, 0, 0], sizes = [1, 10, 2], strides = [1, 1, 1]} : vector<10x10x2xf32> to vector<1x10x2xf32>
    %117 = vector.shape_cast %116 : vector<1x10x2xf32> to vector<10x2xf32>
    %118 = vector.broadcast %115 : vector<1x2xf32> to vector<10x2xf32>
    %119 = arith.mulf %118, %117 : vector<10x2xf32>
    %120 = arith.addf %114, %119 : vector<10x2xf32>
    %121 = vector.extract_strided_slice %76 {offsets = [7, 0], sizes = [1, 2], strides = [1, 1]} : vector<10x2xf32> to vector<1x2xf32>
    %122 = vector.extract_strided_slice %79 {offsets = [7, 0, 0], sizes = [1, 10, 2], strides = [1, 1, 1]} : vector<10x10x2xf32> to vector<1x10x2xf32>
    %123 = vector.shape_cast %122 : vector<1x10x2xf32> to vector<10x2xf32>
    %124 = vector.broadcast %121 : vector<1x2xf32> to vector<10x2xf32>
    %125 = arith.mulf %124, %123 : vector<10x2xf32>
    %126 = arith.addf %120, %125 : vector<10x2xf32>
    %127 = vector.extract_strided_slice %76 {offsets = [8, 0], sizes = [1, 2], strides = [1, 1]} : vector<10x2xf32> to vector<1x2xf32>
    %128 = vector.extract_strided_slice %79 {offsets = [8, 0, 0], sizes = [1, 10, 2], strides = [1, 1, 1]} : vector<10x10x2xf32> to vector<1x10x2xf32>
    %129 = vector.shape_cast %128 : vector<1x10x2xf32> to vector<10x2xf32>
    %130 = vector.broadcast %127 : vector<1x2xf32> to vector<10x2xf32>
    %131 = arith.mulf %130, %129 : vector<10x2xf32>
    %132 = arith.addf %126, %131 : vector<10x2xf32>
    %133 = vector.extract_strided_slice %76 {offsets = [9, 0], sizes = [1, 2], strides = [1, 1]} : vector<10x2xf32> to vector<1x2xf32>
    %134 = vector.extract_strided_slice %79 {offsets = [9, 0, 0], sizes = [1, 10, 2], strides = [1, 1, 1]} : vector<10x10x2xf32> to vector<1x10x2xf32>
    %135 = vector.shape_cast %134 : vector<1x10x2xf32> to vector<10x2xf32>
    %136 = vector.broadcast %133 : vector<1x2xf32> to vector<10x2xf32>
    %137 = arith.mulf %136, %135 : vector<10x2xf32>
    %138 = arith.addf %132, %137 : vector<10x2xf32>
    %cst_13 = arith.constant 0.000000e+00 : f32
    %139 = vector.broadcast %cst_13 : f32 to vector<10x2xf32>
    %140 = arith.cmpf oge, %138, %139 : vector<10x2xf32>
    %cst_14 = arith.constant 1.000000e+00 : f32
    %cst_15 = arith.constant -1.000000e+00 : f32
    %141 = vector.broadcast %cst_14 : f32 to vector<10x2xf32>
    %142 = vector.broadcast %cst_15 : f32 to vector<10x2xf32>
    %143 = arith.select %140, %141, %142 : vector<10x2xi1>, vector<10x2xf32>
    %144 = math.absf %138 : vector<10x2xf32>
    %cst_16 = arith.constant 9.99999996E-13 : f32
    %145 = vector.broadcast %cst_16 : f32 to vector<10x2xf32>
    %146 = arith.cmpf oge, %144, %145 : vector<10x2xf32>
    %cst_17 = arith.constant 9.99999995E+11 : f32
    %147 = vector.broadcast %cst_17 : f32 to vector<10x2xf32>
    %148 = arith.mulf %138, %147 : vector<10x2xf32>
    %149 = arith.select %146, %143, %148 : vector<10x2xi1>, vector<10x2xf32>
    %c2_i32 = arith.constant 2 : i32
    %150 = arith.index_cast %c2_i32 : i32 to index
    %c0_18 = arith.constant 0 : index
    %c0_19 = arith.constant 0 : index
    %c0_20 = arith.constant 0 : index
    %151 = vector.load %arg2[%150, %c0_18, %c0_19, %c0_20] : memref<8x10x10x2xf32, #tpu.memory_space<vmem>>, vector<1x10x10x2xf32>
    %152 = vector.shape_cast %151 : vector<1x10x10x2xf32> to vector<10x10x2xf32>
    %153 = vector.extract_strided_slice %149 {offsets = [0, 0], sizes = [1, 2], strides = [1, 1]} : vector<10x2xf32> to vector<1x2xf32>
    %154 = vector.extract_strided_slice %152 {offsets = [0, 0, 0], sizes = [1, 10, 2], strides = [1, 1, 1]} : vector<10x10x2xf32> to vector<1x10x2xf32>
    %155 = vector.shape_cast %154 : vector<1x10x2xf32> to vector<10x2xf32>
    %156 = vector.broadcast %153 : vector<1x2xf32> to vector<10x2xf32>
    %157 = arith.mulf %156, %155 : vector<10x2xf32>
    %158 = vector.extract_strided_slice %149 {offsets = [1, 0], sizes = [1, 2], strides = [1, 1]} : vector<10x2xf32> to vector<1x2xf32>
    %159 = vector.extract_strided_slice %152 {offsets = [1, 0, 0], sizes = [1, 10, 2], strides = [1, 1, 1]} : vector<10x10x2xf32> to vector<1x10x2xf32>
    %160 = vector.shape_cast %159 : vector<1x10x2xf32> to vector<10x2xf32>
    %161 = vector.broadcast %158 : vector<1x2xf32> to vector<10x2xf32>
    %162 = arith.mulf %161, %160 : vector<10x2xf32>
    %163 = arith.addf %157, %162 : vector<10x2xf32>
    %164 = vector.extract_strided_slice %149 {offsets = [2, 0], sizes = [1, 2], strides = [1, 1]} : vector<10x2xf32> to vector<1x2xf32>
    %165 = vector.extract_strided_slice %152 {offsets = [2, 0, 0], sizes = [1, 10, 2], strides = [1, 1, 1]} : vector<10x10x2xf32> to vector<1x10x2xf32>
    %166 = vector.shape_cast %165 : vector<1x10x2xf32> to vector<10x2xf32>
    %167 = vector.broadcast %164 : vector<1x2xf32> to vector<10x2xf32>
    %168 = arith.mulf %167, %166 : vector<10x2xf32>
    %169 = arith.addf %163, %168 : vector<10x2xf32>
    %170 = vector.extract_strided_slice %149 {offsets = [3, 0], sizes = [1, 2], strides = [1, 1]} : vector<10x2xf32> to vector<1x2xf32>
    %171 = vector.extract_strided_slice %152 {offsets = [3, 0, 0], sizes = [1, 10, 2], strides = [1, 1, 1]} : vector<10x10x2xf32> to vector<1x10x2xf32>
    %172 = vector.shape_cast %171 : vector<1x10x2xf32> to vector<10x2xf32>
    %173 = vector.broadcast %170 : vector<1x2xf32> to vector<10x2xf32>
    %174 = arith.mulf %173, %172 : vector<10x2xf32>
    %175 = arith.addf %169, %174 : vector<10x2xf32>
    %176 = vector.extract_strided_slice %149 {offsets = [4, 0], sizes = [1, 2], strides = [1, 1]} : vector<10x2xf32> to vector<1x2xf32>
    %177 = vector.extract_strided_slice %152 {offsets = [4, 0, 0], sizes = [1, 10, 2], strides = [1, 1, 1]} : vector<10x10x2xf32> to vector<1x10x2xf32>
    %178 = vector.shape_cast %177 : vector<1x10x2xf32> to vector<10x2xf32>
    %179 = vector.broadcast %176 : vector<1x2xf32> to vector<10x2xf32>
    %180 = arith.mulf %179, %178 : vector<10x2xf32>
    %181 = arith.addf %175, %180 : vector<10x2xf32>
    %182 = vector.extract_strided_slice %149 {offsets = [5, 0], sizes = [1, 2], strides = [1, 1]} : vector<10x2xf32> to vector<1x2xf32>
    %183 = vector.extract_strided_slice %152 {offsets = [5, 0, 0], sizes = [1, 10, 2], strides = [1, 1, 1]} : vector<10x10x2xf32> to vector<1x10x2xf32>
    %184 = vector.shape_cast %183 : vector<1x10x2xf32> to vector<10x2xf32>
    %185 = vector.broadcast %182 : vector<1x2xf32> to vector<10x2xf32>
    %186 = arith.mulf %185, %184 : vector<10x2xf32>
    %187 = arith.addf %181, %186 : vector<10x2xf32>
    %188 = vector.extract_strided_slice %149 {offsets = [6, 0], sizes = [1, 2], strides = [1, 1]} : vector<10x2xf32> to vector<1x2xf32>
    %189 = vector.extract_strided_slice %152 {offsets = [6, 0, 0], sizes = [1, 10, 2], strides = [1, 1, 1]} : vector<10x10x2xf32> to vector<1x10x2xf32>
    %190 = vector.shape_cast %189 : vector<1x10x2xf32> to vector<10x2xf32>
    %191 = vector.broadcast %188 : vector<1x2xf32> to vector<10x2xf32>
    %192 = arith.mulf %191, %190 : vector<10x2xf32>
    %193 = arith.addf %187, %192 : vector<10x2xf32>
    %194 = vector.extract_strided_slice %149 {offsets = [7, 0], sizes = [1, 2], strides = [1, 1]} : vector<10x2xf32> to vector<1x2xf32>
    %195 = vector.extract_strided_slice %152 {offsets = [7, 0, 0], sizes = [1, 10, 2], strides = [1, 1, 1]} : vector<10x10x2xf32> to vector<1x10x2xf32>
    %196 = vector.shape_cast %195 : vector<1x10x2xf32> to vector<10x2xf32>
    %197 = vector.broadcast %194 : vector<1x2xf32> to vector<10x2xf32>
    %198 = arith.mulf %197, %196 : vector<10x2xf32>
    %199 = arith.addf %193, %198 : vector<10x2xf32>
    %200 = vector.extract_strided_slice %149 {offsets = [8, 0], sizes = [1, 2], strides = [1, 1]} : vector<10x2xf32> to vector<1x2xf32>
    %201 = vector.extract_strided_slice %152 {offsets = [8, 0, 0], sizes = [1, 10, 2], strides = [1, 1, 1]} : vector<10x10x2xf32> to vector<1x10x2xf32>
    %202 = vector.shape_cast %201 : vector<1x10x2xf32> to vector<10x2xf32>
    %203 = vector.broadcast %200 : vector<1x2xf32> to vector<10x2xf32>
    %204 = arith.mulf %203, %202 : vector<10x2xf32>
    %205 = arith.addf %199, %204 : vector<10x2xf32>
    %206 = vector.extract_strided_slice %149 {offsets = [9, 0], sizes = [1, 2], strides = [1, 1]} : vector<10x2xf32> to vector<1x2xf32>
    %207 = vector.extract_strided_slice %152 {offsets = [9, 0, 0], sizes = [1, 10, 2], strides = [1, 1, 1]} : vector<10x10x2xf32> to vector<1x10x2xf32>
    %208 = vector.shape_cast %207 : vector<1x10x2xf32> to vector<10x2xf32>
    %209 = vector.broadcast %206 : vector<1x2xf32> to vector<10x2xf32>
    %210 = arith.mulf %209, %208 : vector<10x2xf32>
    %211 = arith.addf %205, %210 : vector<10x2xf32>
    %cst_21 = arith.constant 0.000000e+00 : f32
    %212 = vector.broadcast %cst_21 : f32 to vector<10x2xf32>
    %213 = arith.cmpf oge, %211, %212 : vector<10x2xf32>
    %cst_22 = arith.constant 1.000000e+00 : f32
    %cst_23 = arith.constant -1.000000e+00 : f32
    %214 = vector.broadcast %cst_22 : f32 to vector<10x2xf32>
    %215 = vector.broadcast %cst_23 : f32 to vector<10x2xf32>
    %216 = arith.select %213, %214, %215 : vector<10x2xi1>, vector<10x2xf32>
    %217 = math.absf %211 : vector<10x2xf32>
    %cst_24 = arith.constant 9.99999996E-13 : f32
    %218 = vector.broadcast %cst_24 : f32 to vector<10x2xf32>
    %219 = arith.cmpf oge, %217, %218 : vector<10x2xf32>
    %cst_25 = arith.constant 9.99999995E+11 : f32
    %220 = vector.broadcast %cst_25 : f32 to vector<10x2xf32>
    %221 = arith.mulf %211, %220 : vector<10x2xf32>
    %222 = arith.select %219, %216, %221 : vector<10x2xi1>, vector<10x2xf32>
    %c3_i32 = arith.constant 3 : i32
    %223 = arith.index_cast %c3_i32 : i32 to index
    %c0_26 = arith.constant 0 : index
    %c0_27 = arith.constant 0 : index
    %c0_28 = arith.constant 0 : index
    %224 = vector.load %arg2[%223, %c0_26, %c0_27, %c0_28] : memref<8x10x10x2xf32, #tpu.memory_space<vmem>>, vector<1x10x10x2xf32>
    %225 = vector.shape_cast %224 : vector<1x10x10x2xf32> to vector<10x10x2xf32>
    %226 = vector.extract_strided_slice %222 {offsets = [0, 0], sizes = [1, 2], strides = [1, 1]} : vector<10x2xf32> to vector<1x2xf32>
    %227 = vector.extract_strided_slice %225 {offsets = [0, 0, 0], sizes = [1, 10, 2], strides = [1, 1, 1]} : vector<10x10x2xf32> to vector<1x10x2xf32>
    %228 = vector.shape_cast %227 : vector<1x10x2xf32> to vector<10x2xf32>
    %229 = vector.broadcast %226 : vector<1x2xf32> to vector<10x2xf32>
    %230 = arith.mulf %229, %228 : vector<10x2xf32>
    %231 = vector.extract_strided_slice %222 {offsets = [1, 0], sizes = [1, 2], strides = [1, 1]} : vector<10x2xf32> to vector<1x2xf32>
    %232 = vector.extract_strided_slice %225 {offsets = [1, 0, 0], sizes = [1, 10, 2], strides = [1, 1, 1]} : vector<10x10x2xf32> to vector<1x10x2xf32>
    %233 = vector.shape_cast %232 : vector<1x10x2xf32> to vector<10x2xf32>
    %234 = vector.broadcast %231 : vector<1x2xf32> to vector<10x2xf32>
    %235 = arith.mulf %234, %233 : vector<10x2xf32>
    %236 = arith.addf %230, %235 : vector<10x2xf32>
    %237 = vector.extract_strided_slice %222 {offsets = [2, 0], sizes = [1, 2], strides = [1, 1]} : vector<10x2xf32> to vector<1x2xf32>
    %238 = vector.extract_strided_slice %225 {offsets = [2, 0, 0], sizes = [1, 10, 2], strides = [1, 1, 1]} : vector<10x10x2xf32> to vector<1x10x2xf32>
    %239 = vector.shape_cast %238 : vector<1x10x2xf32> to vector<10x2xf32>
    %240 = vector.broadcast %237 : vector<1x2xf32> to vector<10x2xf32>
    %241 = arith.mulf %240, %239 : vector<10x2xf32>
    %242 = arith.addf %236, %241 : vector<10x2xf32>
    %243 = vector.extract_strided_slice %222 {offsets = [3, 0], sizes = [1, 2], strides = [1, 1]} : vector<10x2xf32> to vector<1x2xf32>
    %244 = vector.extract_strided_slice %225 {offsets = [3, 0, 0], sizes = [1, 10, 2], strides = [1, 1, 1]} : vector<10x10x2xf32> to vector<1x10x2xf32>
    %245 = vector.shape_cast %244 : vector<1x10x2xf32> to vector<10x2xf32>
    %246 = vector.broadcast %243 : vector<1x2xf32> to vector<10x2xf32>
    %247 = arith.mulf %246, %245 : vector<10x2xf32>
    %248 = arith.addf %242, %247 : vector<10x2xf32>
    %249 = vector.extract_strided_slice %222 {offsets = [4, 0], sizes = [1, 2], strides = [1, 1]} : vector<10x2xf32> to vector<1x2xf32>
    %250 = vector.extract_strided_slice %225 {offsets = [4, 0, 0], sizes = [1, 10, 2], strides = [1, 1, 1]} : vector<10x10x2xf32> to vector<1x10x2xf32>
    %251 = vector.shape_cast %250 : vector<1x10x2xf32> to vector<10x2xf32>
    %252 = vector.broadcast %249 : vector<1x2xf32> to vector<10x2xf32>
    %253 = arith.mulf %252, %251 : vector<10x2xf32>
    %254 = arith.addf %248, %253 : vector<10x2xf32>
    %255 = vector.extract_strided_slice %222 {offsets = [5, 0], sizes = [1, 2], strides = [1, 1]} : vector<10x2xf32> to vector<1x2xf32>
    %256 = vector.extract_strided_slice %225 {offsets = [5, 0, 0], sizes = [1, 10, 2], strides = [1, 1, 1]} : vector<10x10x2xf32> to vector<1x10x2xf32>
    %257 = vector.shape_cast %256 : vector<1x10x2xf32> to vector<10x2xf32>
    %258 = vector.broadcast %255 : vector<1x2xf32> to vector<10x2xf32>
    %259 = arith.mulf %258, %257 : vector<10x2xf32>
    %260 = arith.addf %254, %259 : vector<10x2xf32>
    %261 = vector.extract_strided_slice %222 {offsets = [6, 0], sizes = [1, 2], strides = [1, 1]} : vector<10x2xf32> to vector<1x2xf32>
    %262 = vector.extract_strided_slice %225 {offsets = [6, 0, 0], sizes = [1, 10, 2], strides = [1, 1, 1]} : vector<10x10x2xf32> to vector<1x10x2xf32>
    %263 = vector.shape_cast %262 : vector<1x10x2xf32> to vector<10x2xf32>
    %264 = vector.broadcast %261 : vector<1x2xf32> to vector<10x2xf32>
    %265 = arith.mulf %264, %263 : vector<10x2xf32>
    %266 = arith.addf %260, %265 : vector<10x2xf32>
    %267 = vector.extract_strided_slice %222 {offsets = [7, 0], sizes = [1, 2], strides = [1, 1]} : vector<10x2xf32> to vector<1x2xf32>
    %268 = vector.extract_strided_slice %225 {offsets = [7, 0, 0], sizes = [1, 10, 2], strides = [1, 1, 1]} : vector<10x10x2xf32> to vector<1x10x2xf32>
    %269 = vector.shape_cast %268 : vector<1x10x2xf32> to vector<10x2xf32>
    %270 = vector.broadcast %267 : vector<1x2xf32> to vector<10x2xf32>
    %271 = arith.mulf %270, %269 : vector<10x2xf32>
    %272 = arith.addf %266, %271 : vector<10x2xf32>
    %273 = vector.extract_strided_slice %222 {offsets = [8, 0], sizes = [1, 2], strides = [1, 1]} : vector<10x2xf32> to vector<1x2xf32>
    %274 = vector.extract_strided_slice %225 {offsets = [8, 0, 0], sizes = [1, 10, 2], strides = [1, 1, 1]} : vector<10x10x2xf32> to vector<1x10x2xf32>
    %275 = vector.shape_cast %274 : vector<1x10x2xf32> to vector<10x2xf32>
    %276 = vector.broadcast %273 : vector<1x2xf32> to vector<10x2xf32>
    %277 = arith.mulf %276, %275 : vector<10x2xf32>
    %278 = arith.addf %272, %277 : vector<10x2xf32>
    %279 = vector.extract_strided_slice %222 {offsets = [9, 0], sizes = [1, 2], strides = [1, 1]} : vector<10x2xf32> to vector<1x2xf32>
    %280 = vector.extract_strided_slice %225 {offsets = [9, 0, 0], sizes = [1, 10, 2], strides = [1, 1, 1]} : vector<10x10x2xf32> to vector<1x10x2xf32>
    %281 = vector.shape_cast %280 : vector<1x10x2xf32> to vector<10x2xf32>
    %282 = vector.broadcast %279 : vector<1x2xf32> to vector<10x2xf32>
    %283 = arith.mulf %282, %281 : vector<10x2xf32>
    %284 = arith.addf %278, %283 : vector<10x2xf32>
    %cst_29 = arith.constant 0.000000e+00 : f32
    %285 = vector.broadcast %cst_29 : f32 to vector<10x2xf32>
    %286 = arith.cmpf oge, %284, %285 : vector<10x2xf32>
    %cst_30 = arith.constant 1.000000e+00 : f32
    %cst_31 = arith.constant -1.000000e+00 : f32
    %287 = vector.broadcast %cst_30 : f32 to vector<10x2xf32>
    %288 = vector.broadcast %cst_31 : f32 to vector<10x2xf32>
    %289 = arith.select %286, %287, %288 : vector<10x2xi1>, vector<10x2xf32>
    %290 = math.absf %284 : vector<10x2xf32>
    %cst_32 = arith.constant 9.99999996E-13 : f32
    %291 = vector.broadcast %cst_32 : f32 to vector<10x2xf32>
    %292 = arith.cmpf oge, %290, %291 : vector<10x2xf32>
    %cst_33 = arith.constant 9.99999995E+11 : f32
    %293 = vector.broadcast %cst_33 : f32 to vector<10x2xf32>
    %294 = arith.mulf %284, %293 : vector<10x2xf32>
    %295 = arith.select %292, %289, %294 : vector<10x2xi1>, vector<10x2xf32>
    %c4_i32 = arith.constant 4 : i32
    %296 = arith.index_cast %c4_i32 : i32 to index
    %c0_34 = arith.constant 0 : index
    %c0_35 = arith.constant 0 : index
    %c0_36 = arith.constant 0 : index
    %297 = vector.load %arg2[%296, %c0_34, %c0_35, %c0_36] : memref<8x10x10x2xf32, #tpu.memory_space<vmem>>, vector<1x10x10x2xf32>
    %298 = vector.shape_cast %297 : vector<1x10x10x2xf32> to vector<10x10x2xf32>
    %299 = vector.extract_strided_slice %295 {offsets = [0, 0], sizes = [1, 2], strides = [1, 1]} : vector<10x2xf32> to vector<1x2xf32>
    %300 = vector.extract_strided_slice %298 {offsets = [0, 0, 0], sizes = [1, 10, 2], strides = [1, 1, 1]} : vector<10x10x2xf32> to vector<1x10x2xf32>
    %301 = vector.shape_cast %300 : vector<1x10x2xf32> to vector<10x2xf32>
    %302 = vector.broadcast %299 : vector<1x2xf32> to vector<10x2xf32>
    %303 = arith.mulf %302, %301 : vector<10x2xf32>
    %304 = vector.extract_strided_slice %295 {offsets = [1, 0], sizes = [1, 2], strides = [1, 1]} : vector<10x2xf32> to vector<1x2xf32>
    %305 = vector.extract_strided_slice %298 {offsets = [1, 0, 0], sizes = [1, 10, 2], strides = [1, 1, 1]} : vector<10x10x2xf32> to vector<1x10x2xf32>
    %306 = vector.shape_cast %305 : vector<1x10x2xf32> to vector<10x2xf32>
    %307 = vector.broadcast %304 : vector<1x2xf32> to vector<10x2xf32>
    %308 = arith.mulf %307, %306 : vector<10x2xf32>
    %309 = arith.addf %303, %308 : vector<10x2xf32>
    %310 = vector.extract_strided_slice %295 {offsets = [2, 0], sizes = [1, 2], strides = [1, 1]} : vector<10x2xf32> to vector<1x2xf32>
    %311 = vector.extract_strided_slice %298 {offsets = [2, 0, 0], sizes = [1, 10, 2], strides = [1, 1, 1]} : vector<10x10x2xf32> to vector<1x10x2xf32>
    %312 = vector.shape_cast %311 : vector<1x10x2xf32> to vector<10x2xf32>
    %313 = vector.broadcast %310 : vector<1x2xf32> to vector<10x2xf32>
    %314 = arith.mulf %313, %312 : vector<10x2xf32>
    %315 = arith.addf %309, %314 : vector<10x2xf32>
    %316 = vector.extract_strided_slice %295 {offsets = [3, 0], sizes = [1, 2], strides = [1, 1]} : vector<10x2xf32> to vector<1x2xf32>
    %317 = vector.extract_strided_slice %298 {offsets = [3, 0, 0], sizes = [1, 10, 2], strides = [1, 1, 1]} : vector<10x10x2xf32> to vector<1x10x2xf32>
    %318 = vector.shape_cast %317 : vector<1x10x2xf32> to vector<10x2xf32>
    %319 = vector.broadcast %316 : vector<1x2xf32> to vector<10x2xf32>
    %320 = arith.mulf %319, %318 : vector<10x2xf32>
    %321 = arith.addf %315, %320 : vector<10x2xf32>
    %322 = vector.extract_strided_slice %295 {offsets = [4, 0], sizes = [1, 2], strides = [1, 1]} : vector<10x2xf32> to vector<1x2xf32>
    %323 = vector.extract_strided_slice %298 {offsets = [4, 0, 0], sizes = [1, 10, 2], strides = [1, 1, 1]} : vector<10x10x2xf32> to vector<1x10x2xf32>
    %324 = vector.shape_cast %323 : vector<1x10x2xf32> to vector<10x2xf32>
    %325 = vector.broadcast %322 : vector<1x2xf32> to vector<10x2xf32>
    %326 = arith.mulf %325, %324 : vector<10x2xf32>
    %327 = arith.addf %321, %326 : vector<10x2xf32>
    %328 = vector.extract_strided_slice %295 {offsets = [5, 0], sizes = [1, 2], strides = [1, 1]} : vector<10x2xf32> to vector<1x2xf32>
    %329 = vector.extract_strided_slice %298 {offsets = [5, 0, 0], sizes = [1, 10, 2], strides = [1, 1, 1]} : vector<10x10x2xf32> to vector<1x10x2xf32>
    %330 = vector.shape_cast %329 : vector<1x10x2xf32> to vector<10x2xf32>
    %331 = vector.broadcast %328 : vector<1x2xf32> to vector<10x2xf32>
    %332 = arith.mulf %331, %330 : vector<10x2xf32>
    %333 = arith.addf %327, %332 : vector<10x2xf32>
    %334 = vector.extract_strided_slice %295 {offsets = [6, 0], sizes = [1, 2], strides = [1, 1]} : vector<10x2xf32> to vector<1x2xf32>
    %335 = vector.extract_strided_slice %298 {offsets = [6, 0, 0], sizes = [1, 10, 2], strides = [1, 1, 1]} : vector<10x10x2xf32> to vector<1x10x2xf32>
    %336 = vector.shape_cast %335 : vector<1x10x2xf32> to vector<10x2xf32>
    %337 = vector.broadcast %334 : vector<1x2xf32> to vector<10x2xf32>
    %338 = arith.mulf %337, %336 : vector<10x2xf32>
    %339 = arith.addf %333, %338 : vector<10x2xf32>
    %340 = vector.extract_strided_slice %295 {offsets = [7, 0], sizes = [1, 2], strides = [1, 1]} : vector<10x2xf32> to vector<1x2xf32>
    %341 = vector.extract_strided_slice %298 {offsets = [7, 0, 0], sizes = [1, 10, 2], strides = [1, 1, 1]} : vector<10x10x2xf32> to vector<1x10x2xf32>
    %342 = vector.shape_cast %341 : vector<1x10x2xf32> to vector<10x2xf32>
    %343 = vector.broadcast %340 : vector<1x2xf32> to vector<10x2xf32>
    %344 = arith.mulf %343, %342 : vector<10x2xf32>
    %345 = arith.addf %339, %344 : vector<10x2xf32>
    %346 = vector.extract_strided_slice %295 {offsets = [8, 0], sizes = [1, 2], strides = [1, 1]} : vector<10x2xf32> to vector<1x2xf32>
    %347 = vector.extract_strided_slice %298 {offsets = [8, 0, 0], sizes = [1, 10, 2], strides = [1, 1, 1]} : vector<10x10x2xf32> to vector<1x10x2xf32>
    %348 = vector.shape_cast %347 : vector<1x10x2xf32> to vector<10x2xf32>
    %349 = vector.broadcast %346 : vector<1x2xf32> to vector<10x2xf32>
    %350 = arith.mulf %349, %348 : vector<10x2xf32>
    %351 = arith.addf %345, %350 : vector<10x2xf32>
    %352 = vector.extract_strided_slice %295 {offsets = [9, 0], sizes = [1, 2], strides = [1, 1]} : vector<10x2xf32> to vector<1x2xf32>
    %353 = vector.extract_strided_slice %298 {offsets = [9, 0, 0], sizes = [1, 10, 2], strides = [1, 1, 1]} : vector<10x10x2xf32> to vector<1x10x2xf32>
    %354 = vector.shape_cast %353 : vector<1x10x2xf32> to vector<10x2xf32>
    %355 = vector.broadcast %352 : vector<1x2xf32> to vector<10x2xf32>
    %356 = arith.mulf %355, %354 : vector<10x2xf32>
    %357 = arith.addf %351, %356 : vector<10x2xf32>
    %cst_37 = arith.constant 0.000000e+00 : f32
    %358 = vector.broadcast %cst_37 : f32 to vector<10x2xf32>
    %359 = arith.cmpf oge, %357, %358 : vector<10x2xf32>
    %cst_38 = arith.constant 1.000000e+00 : f32
    %cst_39 = arith.constant -1.000000e+00 : f32
    %360 = vector.broadcast %cst_38 : f32 to vector<10x2xf32>
    %361 = vector.broadcast %cst_39 : f32 to vector<10x2xf32>
    %362 = arith.select %359, %360, %361 : vector<10x2xi1>, vector<10x2xf32>
    %363 = math.absf %357 : vector<10x2xf32>
    %cst_40 = arith.constant 9.99999996E-13 : f32
    %364 = vector.broadcast %cst_40 : f32 to vector<10x2xf32>
    %365 = arith.cmpf oge, %363, %364 : vector<10x2xf32>
    %cst_41 = arith.constant 9.99999995E+11 : f32
    %366 = vector.broadcast %cst_41 : f32 to vector<10x2xf32>
    %367 = arith.mulf %357, %366 : vector<10x2xf32>
    %368 = arith.select %365, %362, %367 : vector<10x2xi1>, vector<10x2xf32>
    %c5_i32 = arith.constant 5 : i32
    %369 = arith.index_cast %c5_i32 : i32 to index
    %c0_42 = arith.constant 0 : index
    %c0_43 = arith.constant 0 : index
    %c0_44 = arith.constant 0 : index
    %370 = vector.load %arg2[%369, %c0_42, %c0_43, %c0_44] : memref<8x10x10x2xf32, #tpu.memory_space<vmem>>, vector<1x10x10x2xf32>
    %371 = vector.shape_cast %370 : vector<1x10x10x2xf32> to vector<10x10x2xf32>
    %372 = vector.extract_strided_slice %368 {offsets = [0, 0], sizes = [1, 2], strides = [1, 1]} : vector<10x2xf32> to vector<1x2xf32>
    %373 = vector.extract_strided_slice %371 {offsets = [0, 0, 0], sizes = [1, 10, 2], strides = [1, 1, 1]} : vector<10x10x2xf32> to vector<1x10x2xf32>
    %374 = vector.shape_cast %373 : vector<1x10x2xf32> to vector<10x2xf32>
    %375 = vector.broadcast %372 : vector<1x2xf32> to vector<10x2xf32>
    %376 = arith.mulf %375, %374 : vector<10x2xf32>
    %377 = vector.extract_strided_slice %368 {offsets = [1, 0], sizes = [1, 2], strides = [1, 1]} : vector<10x2xf32> to vector<1x2xf32>
    %378 = vector.extract_strided_slice %371 {offsets = [1, 0, 0], sizes = [1, 10, 2], strides = [1, 1, 1]} : vector<10x10x2xf32> to vector<1x10x2xf32>
    %379 = vector.shape_cast %378 : vector<1x10x2xf32> to vector<10x2xf32>
    %380 = vector.broadcast %377 : vector<1x2xf32> to vector<10x2xf32>
    %381 = arith.mulf %380, %379 : vector<10x2xf32>
    %382 = arith.addf %376, %381 : vector<10x2xf32>
    %383 = vector.extract_strided_slice %368 {offsets = [2, 0], sizes = [1, 2], strides = [1, 1]} : vector<10x2xf32> to vector<1x2xf32>
    %384 = vector.extract_strided_slice %371 {offsets = [2, 0, 0], sizes = [1, 10, 2], strides = [1, 1, 1]} : vector<10x10x2xf32> to vector<1x10x2xf32>
    %385 = vector.shape_cast %384 : vector<1x10x2xf32> to vector<10x2xf32>
    %386 = vector.broadcast %383 : vector<1x2xf32> to vector<10x2xf32>
    %387 = arith.mulf %386, %385 : vector<10x2xf32>
    %388 = arith.addf %382, %387 : vector<10x2xf32>
    %389 = vector.extract_strided_slice %368 {offsets = [3, 0], sizes = [1, 2], strides = [1, 1]} : vector<10x2xf32> to vector<1x2xf32>
    %390 = vector.extract_strided_slice %371 {offsets = [3, 0, 0], sizes = [1, 10, 2], strides = [1, 1, 1]} : vector<10x10x2xf32> to vector<1x10x2xf32>
    %391 = vector.shape_cast %390 : vector<1x10x2xf32> to vector<10x2xf32>
    %392 = vector.broadcast %389 : vector<1x2xf32> to vector<10x2xf32>
    %393 = arith.mulf %392, %391 : vector<10x2xf32>
    %394 = arith.addf %388, %393 : vector<10x2xf32>
    %395 = vector.extract_strided_slice %368 {offsets = [4, 0], sizes = [1, 2], strides = [1, 1]} : vector<10x2xf32> to vector<1x2xf32>
    %396 = vector.extract_strided_slice %371 {offsets = [4, 0, 0], sizes = [1, 10, 2], strides = [1, 1, 1]} : vector<10x10x2xf32> to vector<1x10x2xf32>
    %397 = vector.shape_cast %396 : vector<1x10x2xf32> to vector<10x2xf32>
    %398 = vector.broadcast %395 : vector<1x2xf32> to vector<10x2xf32>
    %399 = arith.mulf %398, %397 : vector<10x2xf32>
    %400 = arith.addf %394, %399 : vector<10x2xf32>
    %401 = vector.extract_strided_slice %368 {offsets = [5, 0], sizes = [1, 2], strides = [1, 1]} : vector<10x2xf32> to vector<1x2xf32>
    %402 = vector.extract_strided_slice %371 {offsets = [5, 0, 0], sizes = [1, 10, 2], strides = [1, 1, 1]} : vector<10x10x2xf32> to vector<1x10x2xf32>
    %403 = vector.shape_cast %402 : vector<1x10x2xf32> to vector<10x2xf32>
    %404 = vector.broadcast %401 : vector<1x2xf32> to vector<10x2xf32>
    %405 = arith.mulf %404, %403 : vector<10x2xf32>
    %406 = arith.addf %400, %405 : vector<10x2xf32>
    %407 = vector.extract_strided_slice %368 {offsets = [6, 0], sizes = [1, 2], strides = [1, 1]} : vector<10x2xf32> to vector<1x2xf32>
    %408 = vector.extract_strided_slice %371 {offsets = [6, 0, 0], sizes = [1, 10, 2], strides = [1, 1, 1]} : vector<10x10x2xf32> to vector<1x10x2xf32>
    %409 = vector.shape_cast %408 : vector<1x10x2xf32> to vector<10x2xf32>
    %410 = vector.broadcast %407 : vector<1x2xf32> to vector<10x2xf32>
    %411 = arith.mulf %410, %409 : vector<10x2xf32>
    %412 = arith.addf %406, %411 : vector<10x2xf32>
    %413 = vector.extract_strided_slice %368 {offsets = [7, 0], sizes = [1, 2], strides = [1, 1]} : vector<10x2xf32> to vector<1x2xf32>
    %414 = vector.extract_strided_slice %371 {offsets = [7, 0, 0], sizes = [1, 10, 2], strides = [1, 1, 1]} : vector<10x10x2xf32> to vector<1x10x2xf32>
    %415 = vector.shape_cast %414 : vector<1x10x2xf32> to vector<10x2xf32>
    %416 = vector.broadcast %413 : vector<1x2xf32> to vector<10x2xf32>
    %417 = arith.mulf %416, %415 : vector<10x2xf32>
    %418 = arith.addf %412, %417 : vector<10x2xf32>
    %419 = vector.extract_strided_slice %368 {offsets = [8, 0], sizes = [1, 2], strides = [1, 1]} : vector<10x2xf32> to vector<1x2xf32>
    %420 = vector.extract_strided_slice %371 {offsets = [8, 0, 0], sizes = [1, 10, 2], strides = [1, 1, 1]} : vector<10x10x2xf32> to vector<1x10x2xf32>
    %421 = vector.shape_cast %420 : vector<1x10x2xf32> to vector<10x2xf32>
    %422 = vector.broadcast %419 : vector<1x2xf32> to vector<10x2xf32>
    %423 = arith.mulf %422, %421 : vector<10x2xf32>
    %424 = arith.addf %418, %423 : vector<10x2xf32>
    %425 = vector.extract_strided_slice %368 {offsets = [9, 0], sizes = [1, 2], strides = [1, 1]} : vector<10x2xf32> to vector<1x2xf32>
    %426 = vector.extract_strided_slice %371 {offsets = [9, 0, 0], sizes = [1, 10, 2], strides = [1, 1, 1]} : vector<10x10x2xf32> to vector<1x10x2xf32>
    %427 = vector.shape_cast %426 : vector<1x10x2xf32> to vector<10x2xf32>
    %428 = vector.broadcast %425 : vector<1x2xf32> to vector<10x2xf32>
    %429 = arith.mulf %428, %427 : vector<10x2xf32>
    %430 = arith.addf %424, %429 : vector<10x2xf32>
    %cst_45 = arith.constant 0.000000e+00 : f32
    %431 = vector.broadcast %cst_45 : f32 to vector<10x2xf32>
    %432 = arith.cmpf oge, %430, %431 : vector<10x2xf32>
    %cst_46 = arith.constant 1.000000e+00 : f32
    %cst_47 = arith.constant -1.000000e+00 : f32
    %433 = vector.broadcast %cst_46 : f32 to vector<10x2xf32>
    %434 = vector.broadcast %cst_47 : f32 to vector<10x2xf32>
    %435 = arith.select %432, %433, %434 : vector<10x2xi1>, vector<10x2xf32>
    %436 = math.absf %430 : vector<10x2xf32>
    %cst_48 = arith.constant 9.99999996E-13 : f32
    %437 = vector.broadcast %cst_48 : f32 to vector<10x2xf32>
    %438 = arith.cmpf oge, %436, %437 : vector<10x2xf32>
    %cst_49 = arith.constant 9.99999995E+11 : f32
    %439 = vector.broadcast %cst_49 : f32 to vector<10x2xf32>
    %440 = arith.mulf %430, %439 : vector<10x2xf32>
    %441 = arith.select %438, %435, %440 : vector<10x2xi1>, vector<10x2xf32>
    %c6_i32 = arith.constant 6 : i32
    %442 = arith.index_cast %c6_i32 : i32 to index
    %c0_50 = arith.constant 0 : index
    %c0_51 = arith.constant 0 : index
    %c0_52 = arith.constant 0 : index
    %443 = vector.load %arg2[%442, %c0_50, %c0_51, %c0_52] : memref<8x10x10x2xf32, #tpu.memory_space<vmem>>, vector<1x10x10x2xf32>
    %444 = vector.shape_cast %443 : vector<1x10x10x2xf32> to vector<10x10x2xf32>
    %445 = vector.extract_strided_slice %441 {offsets = [0, 0], sizes = [1, 2], strides = [1, 1]} : vector<10x2xf32> to vector<1x2xf32>
    %446 = vector.extract_strided_slice %444 {offsets = [0, 0, 0], sizes = [1, 10, 2], strides = [1, 1, 1]} : vector<10x10x2xf32> to vector<1x10x2xf32>
    %447 = vector.shape_cast %446 : vector<1x10x2xf32> to vector<10x2xf32>
    %448 = vector.broadcast %445 : vector<1x2xf32> to vector<10x2xf32>
    %449 = arith.mulf %448, %447 : vector<10x2xf32>
    %450 = vector.extract_strided_slice %441 {offsets = [1, 0], sizes = [1, 2], strides = [1, 1]} : vector<10x2xf32> to vector<1x2xf32>
    %451 = vector.extract_strided_slice %444 {offsets = [1, 0, 0], sizes = [1, 10, 2], strides = [1, 1, 1]} : vector<10x10x2xf32> to vector<1x10x2xf32>
    %452 = vector.shape_cast %451 : vector<1x10x2xf32> to vector<10x2xf32>
    %453 = vector.broadcast %450 : vector<1x2xf32> to vector<10x2xf32>
    %454 = arith.mulf %453, %452 : vector<10x2xf32>
    %455 = arith.addf %449, %454 : vector<10x2xf32>
    %456 = vector.extract_strided_slice %441 {offsets = [2, 0], sizes = [1, 2], strides = [1, 1]} : vector<10x2xf32> to vector<1x2xf32>
    %457 = vector.extract_strided_slice %444 {offsets = [2, 0, 0], sizes = [1, 10, 2], strides = [1, 1, 1]} : vector<10x10x2xf32> to vector<1x10x2xf32>
    %458 = vector.shape_cast %457 : vector<1x10x2xf32> to vector<10x2xf32>
    %459 = vector.broadcast %456 : vector<1x2xf32> to vector<10x2xf32>
    %460 = arith.mulf %459, %458 : vector<10x2xf32>
    %461 = arith.addf %455, %460 : vector<10x2xf32>
    %462 = vector.extract_strided_slice %441 {offsets = [3, 0], sizes = [1, 2], strides = [1, 1]} : vector<10x2xf32> to vector<1x2xf32>
    %463 = vector.extract_strided_slice %444 {offsets = [3, 0, 0], sizes = [1, 10, 2], strides = [1, 1, 1]} : vector<10x10x2xf32> to vector<1x10x2xf32>
    %464 = vector.shape_cast %463 : vector<1x10x2xf32> to vector<10x2xf32>
    %465 = vector.broadcast %462 : vector<1x2xf32> to vector<10x2xf32>
    %466 = arith.mulf %465, %464 : vector<10x2xf32>
    %467 = arith.addf %461, %466 : vector<10x2xf32>
    %468 = vector.extract_strided_slice %441 {offsets = [4, 0], sizes = [1, 2], strides = [1, 1]} : vector<10x2xf32> to vector<1x2xf32>
    %469 = vector.extract_strided_slice %444 {offsets = [4, 0, 0], sizes = [1, 10, 2], strides = [1, 1, 1]} : vector<10x10x2xf32> to vector<1x10x2xf32>
    %470 = vector.shape_cast %469 : vector<1x10x2xf32> to vector<10x2xf32>
    %471 = vector.broadcast %468 : vector<1x2xf32> to vector<10x2xf32>
    %472 = arith.mulf %471, %470 : vector<10x2xf32>
    %473 = arith.addf %467, %472 : vector<10x2xf32>
    %474 = vector.extract_strided_slice %441 {offsets = [5, 0], sizes = [1, 2], strides = [1, 1]} : vector<10x2xf32> to vector<1x2xf32>
    %475 = vector.extract_strided_slice %444 {offsets = [5, 0, 0], sizes = [1, 10, 2], strides = [1, 1, 1]} : vector<10x10x2xf32> to vector<1x10x2xf32>
    %476 = vector.shape_cast %475 : vector<1x10x2xf32> to vector<10x2xf32>
    %477 = vector.broadcast %474 : vector<1x2xf32> to vector<10x2xf32>
    %478 = arith.mulf %477, %476 : vector<10x2xf32>
    %479 = arith.addf %473, %478 : vector<10x2xf32>
    %480 = vector.extract_strided_slice %441 {offsets = [6, 0], sizes = [1, 2], strides = [1, 1]} : vector<10x2xf32> to vector<1x2xf32>
    %481 = vector.extract_strided_slice %444 {offsets = [6, 0, 0], sizes = [1, 10, 2], strides = [1, 1, 1]} : vector<10x10x2xf32> to vector<1x10x2xf32>
    %482 = vector.shape_cast %481 : vector<1x10x2xf32> to vector<10x2xf32>
    %483 = vector.broadcast %480 : vector<1x2xf32> to vector<10x2xf32>
    %484 = arith.mulf %483, %482 : vector<10x2xf32>
    %485 = arith.addf %479, %484 : vector<10x2xf32>
    %486 = vector.extract_strided_slice %441 {offsets = [7, 0], sizes = [1, 2], strides = [1, 1]} : vector<10x2xf32> to vector<1x2xf32>
    %487 = vector.extract_strided_slice %444 {offsets = [7, 0, 0], sizes = [1, 10, 2], strides = [1, 1, 1]} : vector<10x10x2xf32> to vector<1x10x2xf32>
    %488 = vector.shape_cast %487 : vector<1x10x2xf32> to vector<10x2xf32>
    %489 = vector.broadcast %486 : vector<1x2xf32> to vector<10x2xf32>
    %490 = arith.mulf %489, %488 : vector<10x2xf32>
    %491 = arith.addf %485, %490 : vector<10x2xf32>
    %492 = vector.extract_strided_slice %441 {offsets = [8, 0], sizes = [1, 2], strides = [1, 1]} : vector<10x2xf32> to vector<1x2xf32>
    %493 = vector.extract_strided_slice %444 {offsets = [8, 0, 0], sizes = [1, 10, 2], strides = [1, 1, 1]} : vector<10x10x2xf32> to vector<1x10x2xf32>
    %494 = vector.shape_cast %493 : vector<1x10x2xf32> to vector<10x2xf32>
    %495 = vector.broadcast %492 : vector<1x2xf32> to vector<10x2xf32>
    %496 = arith.mulf %495, %494 : vector<10x2xf32>
    %497 = arith.addf %491, %496 : vector<10x2xf32>
    %498 = vector.extract_strided_slice %441 {offsets = [9, 0], sizes = [1, 2], strides = [1, 1]} : vector<10x2xf32> to vector<1x2xf32>
    %499 = vector.extract_strided_slice %444 {offsets = [9, 0, 0], sizes = [1, 10, 2], strides = [1, 1, 1]} : vector<10x10x2xf32> to vector<1x10x2xf32>
    %500 = vector.shape_cast %499 : vector<1x10x2xf32> to vector<10x2xf32>
    %501 = vector.broadcast %498 : vector<1x2xf32> to vector<10x2xf32>
    %502 = arith.mulf %501, %500 : vector<10x2xf32>
    %503 = arith.addf %497, %502 : vector<10x2xf32>
    %cst_53 = arith.constant 0.000000e+00 : f32
    %504 = vector.broadcast %cst_53 : f32 to vector<10x2xf32>
    %505 = arith.cmpf oge, %503, %504 : vector<10x2xf32>
    %cst_54 = arith.constant 1.000000e+00 : f32
    %cst_55 = arith.constant -1.000000e+00 : f32
    %506 = vector.broadcast %cst_54 : f32 to vector<10x2xf32>
    %507 = vector.broadcast %cst_55 : f32 to vector<10x2xf32>
    %508 = arith.select %505, %506, %507 : vector<10x2xi1>, vector<10x2xf32>
    %509 = math.absf %503 : vector<10x2xf32>
    %cst_56 = arith.constant 9.99999996E-13 : f32
    %510 = vector.broadcast %cst_56 : f32 to vector<10x2xf32>
    %511 = arith.cmpf oge, %509, %510 : vector<10x2xf32>
    %cst_57 = arith.constant 9.99999995E+11 : f32
    %512 = vector.broadcast %cst_57 : f32 to vector<10x2xf32>
    %513 = arith.mulf %503, %512 : vector<10x2xf32>
    %514 = arith.select %511, %508, %513 : vector<10x2xi1>, vector<10x2xf32>
    %c7_i32 = arith.constant 7 : i32
    %515 = arith.index_cast %c7_i32 : i32 to index
    %c0_58 = arith.constant 0 : index
    %c0_59 = arith.constant 0 : index
    %c0_60 = arith.constant 0 : index
    %516 = vector.load %arg2[%515, %c0_58, %c0_59, %c0_60] : memref<8x10x10x2xf32, #tpu.memory_space<vmem>>, vector<1x10x10x2xf32>
    %517 = vector.shape_cast %516 : vector<1x10x10x2xf32> to vector<10x10x2xf32>
    %518 = vector.extract_strided_slice %514 {offsets = [0, 0], sizes = [1, 2], strides = [1, 1]} : vector<10x2xf32> to vector<1x2xf32>
    %519 = vector.extract_strided_slice %517 {offsets = [0, 0, 0], sizes = [1, 10, 2], strides = [1, 1, 1]} : vector<10x10x2xf32> to vector<1x10x2xf32>
    %520 = vector.shape_cast %519 : vector<1x10x2xf32> to vector<10x2xf32>
    %521 = vector.broadcast %518 : vector<1x2xf32> to vector<10x2xf32>
    %522 = arith.mulf %521, %520 : vector<10x2xf32>
    %523 = vector.extract_strided_slice %514 {offsets = [1, 0], sizes = [1, 2], strides = [1, 1]} : vector<10x2xf32> to vector<1x2xf32>
    %524 = vector.extract_strided_slice %517 {offsets = [1, 0, 0], sizes = [1, 10, 2], strides = [1, 1, 1]} : vector<10x10x2xf32> to vector<1x10x2xf32>
    %525 = vector.shape_cast %524 : vector<1x10x2xf32> to vector<10x2xf32>
    %526 = vector.broadcast %523 : vector<1x2xf32> to vector<10x2xf32>
    %527 = arith.mulf %526, %525 : vector<10x2xf32>
    %528 = arith.addf %522, %527 : vector<10x2xf32>
    %529 = vector.extract_strided_slice %514 {offsets = [2, 0], sizes = [1, 2], strides = [1, 1]} : vector<10x2xf32> to vector<1x2xf32>
    %530 = vector.extract_strided_slice %517 {offsets = [2, 0, 0], sizes = [1, 10, 2], strides = [1, 1, 1]} : vector<10x10x2xf32> to vector<1x10x2xf32>
    %531 = vector.shape_cast %530 : vector<1x10x2xf32> to vector<10x2xf32>
    %532 = vector.broadcast %529 : vector<1x2xf32> to vector<10x2xf32>
    %533 = arith.mulf %532, %531 : vector<10x2xf32>
    %534 = arith.addf %528, %533 : vector<10x2xf32>
    %535 = vector.extract_strided_slice %514 {offsets = [3, 0], sizes = [1, 2], strides = [1, 1]} : vector<10x2xf32> to vector<1x2xf32>
    %536 = vector.extract_strided_slice %517 {offsets = [3, 0, 0], sizes = [1, 10, 2], strides = [1, 1, 1]} : vector<10x10x2xf32> to vector<1x10x2xf32>
    %537 = vector.shape_cast %536 : vector<1x10x2xf32> to vector<10x2xf32>
    %538 = vector.broadcast %535 : vector<1x2xf32> to vector<10x2xf32>
    %539 = arith.mulf %538, %537 : vector<10x2xf32>
    %540 = arith.addf %534, %539 : vector<10x2xf32>
    %541 = vector.extract_strided_slice %514 {offsets = [4, 0], sizes = [1, 2], strides = [1, 1]} : vector<10x2xf32> to vector<1x2xf32>
    %542 = vector.extract_strided_slice %517 {offsets = [4, 0, 0], sizes = [1, 10, 2], strides = [1, 1, 1]} : vector<10x10x2xf32> to vector<1x10x2xf32>
    %543 = vector.shape_cast %542 : vector<1x10x2xf32> to vector<10x2xf32>
    %544 = vector.broadcast %541 : vector<1x2xf32> to vector<10x2xf32>
    %545 = arith.mulf %544, %543 : vector<10x2xf32>
    %546 = arith.addf %540, %545 : vector<10x2xf32>
    %547 = vector.extract_strided_slice %514 {offsets = [5, 0], sizes = [1, 2], strides = [1, 1]} : vector<10x2xf32> to vector<1x2xf32>
    %548 = vector.extract_strided_slice %517 {offsets = [5, 0, 0], sizes = [1, 10, 2], strides = [1, 1, 1]} : vector<10x10x2xf32> to vector<1x10x2xf32>
    %549 = vector.shape_cast %548 : vector<1x10x2xf32> to vector<10x2xf32>
    %550 = vector.broadcast %547 : vector<1x2xf32> to vector<10x2xf32>
    %551 = arith.mulf %550, %549 : vector<10x2xf32>
    %552 = arith.addf %546, %551 : vector<10x2xf32>
    %553 = vector.extract_strided_slice %514 {offsets = [6, 0], sizes = [1, 2], strides = [1, 1]} : vector<10x2xf32> to vector<1x2xf32>
    %554 = vector.extract_strided_slice %517 {offsets = [6, 0, 0], sizes = [1, 10, 2], strides = [1, 1, 1]} : vector<10x10x2xf32> to vector<1x10x2xf32>
    %555 = vector.shape_cast %554 : vector<1x10x2xf32> to vector<10x2xf32>
    %556 = vector.broadcast %553 : vector<1x2xf32> to vector<10x2xf32>
    %557 = arith.mulf %556, %555 : vector<10x2xf32>
    %558 = arith.addf %552, %557 : vector<10x2xf32>
    %559 = vector.extract_strided_slice %514 {offsets = [7, 0], sizes = [1, 2], strides = [1, 1]} : vector<10x2xf32> to vector<1x2xf32>
    %560 = vector.extract_strided_slice %517 {offsets = [7, 0, 0], sizes = [1, 10, 2], strides = [1, 1, 1]} : vector<10x10x2xf32> to vector<1x10x2xf32>
    %561 = vector.shape_cast %560 : vector<1x10x2xf32> to vector<10x2xf32>
    %562 = vector.broadcast %559 : vector<1x2xf32> to vector<10x2xf32>
    %563 = arith.mulf %562, %561 : vector<10x2xf32>
    %564 = arith.addf %558, %563 : vector<10x2xf32>
    %565 = vector.extract_strided_slice %514 {offsets = [8, 0], sizes = [1, 2], strides = [1, 1]} : vector<10x2xf32> to vector<1x2xf32>
    %566 = vector.extract_strided_slice %517 {offsets = [8, 0, 0], sizes = [1, 10, 2], strides = [1, 1, 1]} : vector<10x10x2xf32> to vector<1x10x2xf32>
    %567 = vector.shape_cast %566 : vector<1x10x2xf32> to vector<10x2xf32>
    %568 = vector.broadcast %565 : vector<1x2xf32> to vector<10x2xf32>
    %569 = arith.mulf %568, %567 : vector<10x2xf32>
    %570 = arith.addf %564, %569 : vector<10x2xf32>
    %571 = vector.extract_strided_slice %514 {offsets = [9, 0], sizes = [1, 2], strides = [1, 1]} : vector<10x2xf32> to vector<1x2xf32>
    %572 = vector.extract_strided_slice %517 {offsets = [9, 0, 0], sizes = [1, 10, 2], strides = [1, 1, 1]} : vector<10x10x2xf32> to vector<1x10x2xf32>
    %573 = vector.shape_cast %572 : vector<1x10x2xf32> to vector<10x2xf32>
    %574 = vector.broadcast %571 : vector<1x2xf32> to vector<10x2xf32>
    %575 = arith.mulf %574, %573 : vector<10x2xf32>
    %576 = arith.addf %570, %575 : vector<10x2xf32>
    %cst_61 = arith.constant 0.000000e+00 : f32
    %577 = vector.broadcast %cst_61 : f32 to vector<10x2xf32>
    %578 = arith.cmpf oge, %576, %577 : vector<10x2xf32>
    %cst_62 = arith.constant 1.000000e+00 : f32
    %cst_63 = arith.constant -1.000000e+00 : f32
    %579 = vector.broadcast %cst_62 : f32 to vector<10x2xf32>
    %580 = vector.broadcast %cst_63 : f32 to vector<10x2xf32>
    %581 = arith.select %578, %579, %580 : vector<10x2xi1>, vector<10x2xf32>
    %582 = math.absf %576 : vector<10x2xf32>
    %cst_64 = arith.constant 9.99999996E-13 : f32
    %583 = vector.broadcast %cst_64 : f32 to vector<10x2xf32>
    %584 = arith.cmpf oge, %582, %583 : vector<10x2xf32>
    %cst_65 = arith.constant 9.99999995E+11 : f32
    %585 = vector.broadcast %cst_65 : f32 to vector<10x2xf32>
    %586 = arith.mulf %576, %585 : vector<10x2xf32>
    %587 = arith.select %584, %581, %586 : vector<10x2xi1>, vector<10x2xf32>
    %c8_i32 = arith.constant 8 : i32
    %c0_66 = arith.constant 0 : index
    %c0_67 = arith.constant 0 : index
    %588 = vector.load %arg7[%c0_66, %c0_67] : memref<10x2xf32, #tpu.memory_space<vmem>>, vector<10x2xf32>
    tpu.vector_store %arg7[%c0_66, %c0_67], %587 {strides = array<i32>} : memref<10x2xf32, #tpu.memory_space<vmem>>, vector<10x2xf32>,
    %c0_i32_68 = arith.constant 0 : i32
    %589 = arith.cmpi eq, %arg1, %c0_i32_68 : i32
    %590 = arith.extui %589 : i1 to i32
    %c0_i32_69 = arith.constant 0 : i32
    %591 = arith.cmpi ne, %590, %c0_i32_69 : i32
    scf.if %591 {
      %c0_70 = arith.constant 0 : index
      %c0_71 = arith.constant 0 : index
      %592 = vector.load %arg4[%c0_70, %c0_71] : memref<10x1xf32, #tpu.memory_space<vmem>>, vector<10x1xf32>
      %593 = vector.broadcast %592 : vector<10x1xf32> to vector<10x2xf32>
      %594 = arith.mulf %587, %593 : vector<10x2xf32>
      %cst_72 = arith.constant dense<0.000000e+00> : vector<2xf32>
      %595 = vector.multi_reduction <add>, %594, %cst_72 [0] : vector<10x2xf32> to vector<2xf32>
      %596 = vector.shape_cast %595 : vector<2xf32> to vector<1x2xf32>
      %c0_73 = arith.constant 0 : index
      %c0_74 = arith.constant 0 : index
      %597 = vector.load %arg5[%c0_73, %c0_74] : memref<1x1xf32, #tpu.memory_space<vmem>>, vector<1x1xf32>
      %598 = vector.broadcast %597 : vector<1x1xf32> to vector<1x2xf32>
      %599 = arith.addf %596, %598 : vector<1x2xf32>
      %c0_75 = arith.constant 0 : index
      %c0_76 = arith.constant 0 : index
      %600 = vector.load %arg6[%c0_75, %c0_76] : memref<1x2xf32, #tpu.memory_space<vmem>>, vector<1x2xf32>
      tpu.vector_store %arg6[%c0_75, %c0_76], %599 {strides = array<i32>} : memref<1x2xf32, #tpu.memory_space<vmem>>, vector<1x2xf32>,
    } else {
    }
    return
  }
  func.func @transform_0(%arg0: i32, %arg1: i32) -> (i32, i32, i32, i32) {
    %c0_i32 = arith.constant 0 : i32
    %c0_i32_0 = arith.constant 0 : i32
    %c0_i32_1 = arith.constant 0 : i32
    return %arg1, %c0_i32, %c0_i32_0, %arg0 : i32, i32, i32, i32
  }
  func.func @transform_1(%arg0: i32, %arg1: i32) -> (i32, i32) {
    %c0_i32 = arith.constant 0 : i32
    %c0_i32_0 = arith.constant 0 : i32
    %c0_i32_1 = arith.constant 0 : i32
    return %c0_i32, %c0_i32_0 : i32, i32
  }
  func.func @transform_2(%arg0: i32, %arg1: i32) -> (i32, i32) {
    %c0_i32 = arith.constant 0 : i32
    %c0_i32_0 = arith.constant 0 : i32
    %c0_i32_1 = arith.constant 0 : i32
    return %c0_i32, %c0_i32_0 : i32, i32
  }
  func.func @transform_3(%arg0: i32, %arg1: i32) -> (i32, i32) {
    %c0_i32 = arith.constant 0 : i32
    %c0_i32_0 = arith.constant 0 : i32
    %c0_i32_1 = arith.constant 0 : i32
    return %c0_i32, %c0_i32_0 : i32, i32
  }
  func.func @transform_4(%arg0: i32, %arg1: i32) -> (i32, i32) {
    %c0_i32 = arith.constant 0 : i32
    %c0_i32_0 = arith.constant 0 : i32
    return %c0_i32, %arg0 : i32, i32
  }
}

</mosaic_0001>

<llo_original>
// kernel: tn_forward.1
$region0: #{tn_forward.1}
  #allocation0 [shape = 'u32[]', space=smem, size = 0x4, offset = 0x4, fixed_abs, tag = 'smem constant byte address 0x4 - core index']
  #allocation1 [shape = 'u32[144,128]{1,0:T(1,128)}', space=vmem, size = 0x12000, scoped, tag = 'internal scratch']
  #allocation2 [shape = 'f32[10,2]{1,0:T(8,128)}', space=vmem, size = 0x2000, scoped, tag = 'scratch operand']
  #allocation3 [shape = 'f32[1,1]{1,0:T(1,128)S(1)}', space=vmem, size = 0x200, scoped, tag = 'scoped memory for tn_forward.1']
  %s0 = inlined_call_operand.vmem [shape: f32[8,10,10,2], index: 0, kind: input, shape index: {}]
  %s1 = inlined_call_operand.vmem [shape: f32[10,2], index: 1, kind: input, shape index: {}]
  %s2 = inlined_call_operand.vmem [shape: f32[10,1], index: 2, kind: input, shape index: {}]
  %s3 = inlined_call_operand.<no memory space> [shape: f32[1,1], index: 3, kind: input, shape index: {}]
  %s4 = inlined_call_operand.hbm [shape: f32[1,2], index: 4, kind: output, shape index: {}]
  %s5 = sld [smem:[#allocation0]]
  $region34: #{tn_forward.1} parent=0
    _
  %s7 = ssub.s32 1, %s5
  %s8 = scalar_select 0, %s7, %s5
  %v9 = vstv %s3
  %10 = vst [vmem:[#allocation3] sm:$0x1] %v9
  $region1: #{tn_forward.1} parent=0
    #allocation4 [shape = 'u8[512]{0}', space=vmem, size = 0x400, scoped, tag = 'output window, operand 0, single buffered']
    #allocation5 [shape = 's32[1]{0}', space=sflag, size = 0x4, scoped, tag = 'scoped memory for tn_forward.1']
    %11 = vsyncpa [#allocation5], 0
    // Predicated region
    $region2: #{tn_forward.1} parent=1 // pred_check
      _
    $region3: #{tn_forward.1} parent=1 // pred_check_branch
      %13 = sbr.rel (0) target = $region5
    $region4: #{tn_forward.1} parent=1 // pred_region
      _
    $region5: #{tn_forward.1} parent=1 // pred_fallthru
      _
    // Predicated region
    $region6: #{tn_forward.1} parent=1 // pred_check
      _
    $region7: #{tn_forward.1} parent=1 // pred_check_branch
      %15 = sbr.rel (0) target = $region9
    $region8: #{tn_forward.1} parent=1 // pred_region
      _
    $region9: #{tn_forward.1} parent=1 // pred_fallthru
      _
    // Predicated region
    $region10: #{tn_forward.1} parent=1 // pred_check
      _
    $region11: #{tn_forward.1} parent=1 // pred_check_branch
      %17 = sbr.rel (0) target = $region13
    $region12: #{tn_forward.1} parent=1 // pred_region
      _
    $region13: #{tn_forward.1} parent=1 // pred_fallthru
      _
    // Predicated region
    $region14: #{tn_forward.1} parent=1 // pred_check
      _
    $region15: #{tn_forward.1} parent=1 // pred_check_branch
      %19 = sbr.rel (0) target = $region17
    $region16: #{tn_forward.1} parent=1 // pred_region
      _
    $region17: #{tn_forward.1} parent=1 // pred_fallthru
      _
    %p20 = scmp.eq.s32.totalorder 0, 0
    // Predicated region
    $region18: #{tn_forward.1} parent=1 // pred_check
      %p21 = pneg %p20
    $region19: #{tn_forward.1} parent=1 // pred_check_branch
      %23 = sbr.rel (%p21) target = $region21
    $region20: #{tn_forward.1} parent=1 // pred_region
      %v24 = vld [vmem:[%s1] sm:$0xff]
      %v25 = vld [vmem:[%s1 + $0x8] sm:$0x3]
      %vm26 = vcmask 15360
      %27 = vst.msk [vmem:[#allocation2] sm:$0xff] %vm26, %v24
      %vm28 = vcmask 9216
      %29 = vst.msk [vmem:[#allocation2 + $0x8] sm:$0x3] %vm28, %v25
    $region21: #{tn_forward.1} parent=1 // pred_fallthru
      _
    %v30 = vld [vmem:[#allocation2] sm:$0xff]
    %v31 = vld [vmem:[#allocation2 + $0x8] sm:$0x3]
    %v32 = vld [vmem:[%s0] sm:$0xff]
    %v33 = vld [vmem:[%s0 + $0x8] sm:$0x3]
    %v34 = vld [vmem:[%s0 + $0x10] sm:$0xff]
    %v35 = vld [vmem:[%s0 + $0x18] sm:$0x3]
    %v36 = vld [vmem:[%s0 + $0x20] sm:$0xff]
    %v37 = vld [vmem:[%s0 + $0x28] sm:$0x3]
    %v38 = vld [vmem:[%s0 + $0x30] sm:$0xff]
    %v39 = vld [vmem:[%s0 + $0x38] sm:$0x3]
    %v40 = vld [vmem:[%s0 + $0x40] sm:$0xff]
    %v41 = vld [vmem:[%s0 + $0x48] sm:$0x3]
    %v42 = vld [vmem:[%s0 + $0x50] sm:$0xff]
    %v43 = vld [vmem:[%s0 + $0x58] sm:$0x3]
    %v44 = vld [vmem:[%s0 + $0x60] sm:$0xff]
    %v45 = vld [vmem:[%s0 + $0x68] sm:$0x3]
    %v46 = vld [vmem:[%s0 + $0x70] sm:$0xff]
    %v47 = vld [vmem:[%s0 + $0x78] sm:$0x3]
    %v48 = vld [vmem:[%s0 + $0x80] sm:$0xff]
    %v49 = vld [vmem:[%s0 + $0x88] sm:$0x3]
    %v50 = vld [vmem:[%s0 + $0x90] sm:$0xff]
    %v51 = vld [vmem:[%s0 + $0x98] sm:$0x3]
    %v52 = vlaneseq
    %v53 = vshrl.u32 %v52, 7
    %v54 = vsub.s32 0, %v53
    %v55 = vrot.slane %v30, %v54
    %v56 = vmul.f32 %v55, %v32
    %v57 = vmul.f32 %v55, %v33
    %v58 = vlaneseq
    %v59 = vshrl.u32 %v58, 7
    %v60 = vsub.s32 1, %v59
    %v61 = vrot.slane %v30, %v60
    %v62 = vmul.f32 %v61, %v34
    %v63 = vmul.f32 %v61, %v35
    %v64 = vadd.f32 %v56, %v62
    %v65 = vadd.f32 %v57, %v63
    %v66 = vlaneseq
    %v67 = vshrl.u32 %v66, 7
    %v68 = vsub.s32 2, %v67
    %v69 = vrot.slane %v30, %v68
    %v70 = vmul.f32 %v69, %v36
    %v71 = vmul.f32 %v69, %v37
    %v72 = vadd.f32 %v64, %v70
    %v73 = vadd.f32 %v65, %v71
    %v74 = vlaneseq
    %v75 = vshrl.u32 %v74, 7
    %v76 = vsub.s32 3, %v75
    %v77 = vrot.slane %v30, %v76
    %v78 = vmul.f32 %v77, %v38
    %v79 = vmul.f32 %v77, %v39
    %v80 = vadd.f32 %v72, %v78
    %v81 = vadd.f32 %v73, %v79
    %v82 = vlaneseq
    %v83 = vshrl.u32 %v82, 7
    %v84 = vsub.s32 4, %v83
    %v85 = vrot.slane %v30, %v84
    %v86 = vmul.f32 %v85, %v40
    %v87 = vmul.f32 %v85, %v41
    %v88 = vadd.f32 %v80, %v86
    %v89 = vadd.f32 %v81, %v87
    %v90 = vlaneseq
    %v91 = vshrl.u32 %v90, 7
    %v92 = vsub.s32 5, %v91
    %v93 = vrot.slane %v30, %v92
    %v94 = vmul.f32 %v93, %v42
    %v95 = vmul.f32 %v93, %v43
    %v96 = vadd.f32 %v88, %v94
    %v97 = vadd.f32 %v89, %v95
    %v98 = vlaneseq
    %v99 = vshrl.u32 %v98, 7
    %v100 = vsub.s32 6, %v99
    %v101 = vrot.slane %v30, %v100
    %v102 = vmul.f32 %v101, %v44
    %v103 = vmul.f32 %v101, %v45
    %v104 = vadd.f32 %v96, %v102
    %v105 = vadd.f32 %v97, %v103
    %v106 = vlaneseq
    %v107 = vshrl.u32 %v106, 7
    %v108 = vsub.s32 7, %v107
    %v109 = vrot.slane %v30, %v108
    %v110 = vmul.f32 %v109, %v46
    %v111 = vmul.f32 %v109, %v47
    %v112 = vadd.f32 %v104, %v110
    %v113 = vadd.f32 %v105, %v111
    %v114 = vlaneseq
    %v115 = vshrl.u32 %v114, 7
    %v116 = vsub.s32 0, %v115
    %v117 = vrot.slane %v31, %v116
    %v118 = vmul.f32 %v117, %v48
    %v119 = vmul.f32 %v117, %v49
    %v120 = vadd.f32 %v112, %v118
    %v121 = vadd.f32 %v113, %v119
    %v122 = vlaneseq
    %v123 = vshrl.u32 %v122, 7
    %v124 = vsub.s32 1, %v123
    %v125 = vrot.slane %v31, %v124
    %v126 = vmul.f32 %v125, %v50
    %v127 = vmul.f32 %v125, %v51
    %v128 = vadd.f32 %v120, %v126
    %v129 = vadd.f32 %v121, %v127
    %vm130 = vcmp.ge.f32.partialorder %v128, 0.0
    %vm131 = vcmp.ge.f32.partialorder %v129, 0.0
    %v132 = vsel %vm130, 1.0, -1.0
    %v133 = vsel %vm131, 1.0, -1.0
    %v134 = vand.u32 2147483647, %v128
    %v135 = vand.u32 2147483647, %v129
    %vm136 = vcmp.ge.f32.partialorder %v134, 1e-12
    %vm137 = vcmp.ge.f32.partialorder %v135, 1e-12
    %v138 = vmul.f32 %v128, 1e+12
    %v139 = vmul.f32 %v129, 1e+12
    %v140 = vsel %vm136, %v132, %v138
    %v141 = vsel %vm137, %v133, %v139
    %s142 = scalar_lea.vmem %s0, 160
    %v143 = vld [vmem:[%s142] sm:$0xff]
    %v144 = vld [vmem:[%s142 + $0x8] sm:$0x3]
    %v145 = vld [vmem:[%s142 + $0x10] sm:$0xff]
    %v146 = vld [vmem:[%s142 + $0x18] sm:$0x3]
    %v147 = vld [vmem:[%s142 + $0x20] sm:$0xff]
    %v148 = vld [vmem:[%s142 + $0x28] sm:$0x3]
    %v149 = vld [vmem:[%s142 + $0x30] sm:$0xff]
    %v150 = vld [vmem:[%s142 + $0x38] sm:$0x3]
    %v151 = vld [vmem:[%s142 + $0x40] sm:$0xff]
    %v152 = vld [vmem:[%s142 + $0x48] sm:$0x3]
    %v153 = vld [vmem:[%s142 + $0x50] sm:$0xff]
    %v154 = vld [vmem:[%s142 + $0x58] sm:$0x3]
    %v155 = vld [vmem:[%s142 + $0x60] sm:$0xff]
    %v156 = vld [vmem:[%s142 + $0x68] sm:$0x3]
    %v157 = vld [vmem:[%s142 + $0x70] sm:$0xff]
    %v158 = vld [vmem:[%s142 + $0x78] sm:$0x3]
    %v159 = vld [vmem:[%s142 + $0x80] sm:$0xff]
    %v160 = vld [vmem:[%s142 + $0x88] sm:$0x3]
    %v161 = vld [vmem:[%s142 + $0x90] sm:$0xff]
    %v162 = vld [vmem:[%s142 + $0x98] sm:$0x3]
    %v163 = vlaneseq
    %v164 = vshrl.u32 %v163, 7
    %v165 = vsub.s32 0, %v164
    %v166 = vrot.slane %v140, %v165
    %v167 = vmul.f32 %v166, %v143
    %v168 = vmul.f32 %v166, %v144
    %v169 = vlaneseq
    %v170 = vshrl.u32 %v169, 7
    %v171 = vsub.s32 1, %v170
    %v172 = vrot.slane %v140, %v171
    %v173 = vmul.f32 %v172, %v145
    %v174 = vmul.f32 %v172, %v146
    %v175 = vadd.f32 %v167, %v173
    %v176 = vadd.f32 %v168, %v174
    %v177 = vlaneseq
    %v178 = vshrl.u32 %v177, 7
    %v179 = vsub.s32 2, %v178
    %v180 = vrot.slane %v140, %v179
    %v181 = vmul.f32 %v180, %v147
    %v182 = vmul.f32 %v180, %v148
    %v183 = vadd.f32 %v175, %v181
    %v184 = vadd.f32 %v176, %v182
    %v185 = vlaneseq
    %v186 = vshrl.u32 %v185, 7
    %v187 = vsub.s32 3, %v186
    %v188 = vrot.slane %v140, %v187
    %v189 = vmul.f32 %v188, %v149
    %v190 = vmul.f32 %v188, %v150
    %v191 = vadd.f32 %v183, %v189
    %v192 = vadd.f32 %v184, %v190
    %v193 = vlaneseq
    %v194 = vshrl.u32 %v193, 7
    %v195 = vsub.s32 4, %v194
    %v196 = vrot.slane %v140, %v195
    %v197 = vmul.f32 %v196, %v151
    %v198 = vmul.f32 %v196, %v152
    %v199 = vadd.f32 %v191, %v197
    %v200 = vadd.f32 %v192, %v198
    %v201 = vlaneseq
    %v202 = vshrl.u32 %v201, 7
    %v203 = vsub.s32 5, %v202
    %v204 = vrot.slane %v140, %v203
    %v205 = vmul.f32 %v204, %v153
    %v206 = vmul.f32 %v204, %v154
    %v207 = vadd.f32 %v199, %v205
    %v208 = vadd.f32 %v200, %v206
    %v209 = vlaneseq
    %v210 = vshrl.u32 %v209, 7
    %v211 = vsub.s32 6, %v210
    %v212 = vrot.slane %v140, %v211
    %v213 = vmul.f32 %v212, %v155
    %v214 = vmul.f32 %v212, %v156
    %v215 = vadd.f32 %v207, %v213
    %v216 = vadd.f32 %v208, %v214
    %v217 = vlaneseq
    %v218 = vshrl.u32 %v217, 7
    %v219 = vsub.s32 7, %v218
    %v220 = vrot.slane %v140, %v219
    %v221 = vmul.f32 %v220, %v157
    %v222 = vmul.f32 %v220, %v158
    %v223 = vadd.f32 %v215, %v221
    %v224 = vadd.f32 %v216, %v222
    %v225 = vlaneseq
    %v226 = vshrl.u32 %v225, 7
    %v227 = vsub.s32 0, %v226
    %v228 = vrot.slane %v141, %v227
    %v229 = vmul.f32 %v228, %v159
    %v230 = vmul.f32 %v228, %v160
    %v231 = vadd.f32 %v223, %v229
    %v232 = vadd.f32 %v224, %v230
    %v233 = vlaneseq
    %v234 = vshrl.u32 %v233, 7
    %v235 = vsub.s32 1, %v234
    %v236 = vrot.slane %v141, %v235
    %v237 = vmul.f32 %v236, %v161
    %v238 = vmul.f32 %v236, %v162
    %v239 = vadd.f32 %v231, %v237
    %v240 = vadd.f32 %v232, %v238
    %vm241 = vcmp.ge.f32.partialorder %v239, 0.0
    %vm242 = vcmp.ge.f32.partialorder %v240, 0.0
    %v243 = vsel %vm241, 1.0, -1.0
    %v244 = vsel %vm242, 1.0, -1.0
    %v245 = vand.u32 2147483647, %v239
    %v246 = vand.u32 2147483647, %v240
    %vm247 = vcmp.ge.f32.partialorder %v245, 1e-12
    %vm248 = vcmp.ge.f32.partialorder %v246, 1e-12
    %v249 = vmul.f32 %v239, 1e+12
    %v250 = vmul.f32 %v240, 1e+12
    %v251 = vsel %vm247, %v243, %v249
    %v252 = vsel %vm248, %v244, %v250
    %s253 = scalar_lea.vmem %s0, 320
    %v254 = vld [vmem:[%s253] sm:$0xff]
    %v255 = vld [vmem:[%s253 + $0x8] sm:$0x3]
    %v256 = vld [vmem:[%s253 + $0x10] sm:$0xff]
    %v257 = vld [vmem:[%s253 + $0x18] sm:$0x3]
    %v258 = vld [vmem:[%s253 + $0x20] sm:$0xff]
    %v259 = vld [vmem:[%s253 + $0x28] sm:$0x3]
    %v260 = vld [vmem:[%s253 + $0x30] sm:$0xff]
    %v261 = vld [vmem:[%s253 + $0x38] sm:$0x3]
    %v262 = vld [vmem:[%s253 + $0x40] sm:$0xff]
    %v263 = vld [vmem:[%s253 + $0x48] sm:$0x3]
    %v264 = vld [vmem:[%s253 + $0x50] sm:$0xff]
    %v265 = vld [vmem:[%s253 + $0x58] sm:$0x3]
    %v266 = vld [vmem:[%s253 + $0x60] sm:$0xff]
    %v267 = vld [vmem:[%s253 + $0x68] sm:$0x3]
    %v268 = vld [vmem:[%s253 + $0x70] sm:$0xff]
    %v269 = vld [vmem:[%s253 + $0x78] sm:$0x3]
    %v270 = vld [vmem:[%s253 + $0x80] sm:$0xff]
    %v271 = vld [vmem:[%s253 + $0x88] sm:$0x3]
    %v272 = vld [vmem:[%s253 + $0x90] sm:$0xff]
    %v273 = vld [vmem:[%s253 + $0x98] sm:$0x3]
    %v274 = vlaneseq
    %v275 = vshrl.u32 %v274, 7
    %v276 = vsub.s32 0, %v275
    %v277 = vrot.slane %v251, %v276
    %v278 = vmul.f32 %v277, %v254
    %v279 = vmul.f32 %v277, %v255
    %v280 = vlaneseq
    %v281 = vshrl.u32 %v280, 7
    %v282 = vsub.s32 1, %v281
    %v283 = vrot.slane %v251, %v282
    %v284 = vmul.f32 %v283, %v256
    %v285 = vmul.f32 %v283, %v257
    %v286 = vadd.f32 %v278, %v284
    %v287 = vadd.f32 %v279, %v285
    %v288 = vlaneseq
    %v289 = vshrl.u32 %v288, 7
    %v290 = vsub.s32 2, %v289
    %v291 = vrot.slane %v251, %v290
    %v292 = vmul.f32 %v291, %v258
    %v293 = vmul.f32 %v291, %v259
    %v294 = vadd.f32 %v286, %v292
    %v295 = vadd.f32 %v287, %v293
    %v296 = vlaneseq
    %v297 = vshrl.u32 %v296, 7
    %v298 = vsub.s32 3, %v297
    %v299 = vrot.slane %v251, %v298
    %v300 = vmul.f32 %v299, %v260
    %v301 = vmul.f32 %v299, %v261
    %v302 = vadd.f32 %v294, %v300
    %v303 = vadd.f32 %v295, %v301
    %v304 = vlaneseq
    %v305 = vshrl.u32 %v304, 7
    %v306 = vsub.s32 4, %v305
    %v307 = vrot.slane %v251, %v306
    %v308 = vmul.f32 %v307, %v262
    %v309 = vmul.f32 %v307, %v263
    %v310 = vadd.f32 %v302, %v308
    %v311 = vadd.f32 %v303, %v309
    %v312 = vlaneseq
    %v313 = vshrl.u32 %v312, 7
    %v314 = vsub.s32 5, %v313
    %v315 = vrot.slane %v251, %v314
    %v316 = vmul.f32 %v315, %v264
    %v317 = vmul.f32 %v315, %v265
    %v318 = vadd.f32 %v310, %v316
    %v319 = vadd.f32 %v311, %v317
    %v320 = vlaneseq
    %v321 = vshrl.u32 %v320, 7
    %v322 = vsub.s32 6, %v321
    %v323 = vrot.slane %v251, %v322
    %v324 = vmul.f32 %v323, %v266
    %v325 = vmul.f32 %v323, %v267
    %v326 = vadd.f32 %v318, %v324
    %v327 = vadd.f32 %v319, %v325
    %v328 = vlaneseq
    %v329 = vshrl.u32 %v328, 7
    %v330 = vsub.s32 7, %v329
    %v331 = vrot.slane %v251, %v330
    %v332 = vmul.f32 %v331, %v268
    %v333 = vmul.f32 %v331, %v269
    %v334 = vadd.f32 %v326, %v332
    %v335 = vadd.f32 %v327, %v333
    %v336 = vlaneseq
    %v337 = vshrl.u32 %v336, 7
    %v338 = vsub.s32 0, %v337
    %v339 = vrot.slane %v252, %v338
    %v340 = vmul.f32 %v339, %v270
    %v341 = vmul.f32 %v339, %v271
    %v342 = vadd.f32 %v334, %v340
    %v343 = vadd.f32 %v335, %v341
    %v344 = vlaneseq
    %v345 = vshrl.u32 %v344, 7
    %v346 = vsub.s32 1, %v345
    %v347 = vrot.slane %v252, %v346
    %v348 = vmul.f32 %v347, %v272
    %v349 = vmul.f32 %v347, %v273
    %v350 = vadd.f32 %v342, %v348
    %v351 = vadd.f32 %v343, %v349
    %vm352 = vcmp.ge.f32.partialorder %v350, 0.0
    %vm353 = vcmp.ge.f32.partialorder %v351, 0.0
    %v354 = vsel %vm352, 1.0, -1.0
    %v355 = vsel %vm353, 1.0, -1.0
    %v356 = vand.u32 2147483647, %v350
    %v357 = vand.u32 2147483647, %v351
    %vm358 = vcmp.ge.f32.partialorder %v356, 1e-12
    %vm359 = vcmp.ge.f32.partialorder %v357, 1e-12
    %v360 = vmul.f32 %v350, 1e+12
    %v361 = vmul.f32 %v351, 1e+12
    %v362 = vsel %vm358, %v354, %v360
    %v363 = vsel %vm359, %v355, %v361
    %s364 = scalar_lea.vmem %s0, 480
    %v365 = vld [vmem:[%s364] sm:$0xff]
    %v366 = vld [vmem:[%s364 + $0x8] sm:$0x3]
    %v367 = vld [vmem:[%s364 + $0x10] sm:$0xff]
    %v368 = vld [vmem:[%s364 + $0x18] sm:$0x3]
    %v369 = vld [vmem:[%s364 + $0x20] sm:$0xff]
    %v370 = vld [vmem:[%s364 + $0x28] sm:$0x3]
    %v371 = vld [vmem:[%s364 + $0x30] sm:$0xff]
    %v372 = vld [vmem:[%s364 + $0x38] sm:$0x3]
    %v373 = vld [vmem:[%s364 + $0x40] sm:$0xff]
    %v374 = vld [vmem:[%s364 + $0x48] sm:$0x3]
    %v375 = vld [vmem:[%s364 + $0x50] sm:$0xff]
    %v376 = vld [vmem:[%s364 + $0x58] sm:$0x3]
    %v377 = vld [vmem:[%s364 + $0x60] sm:$0xff]
    %v378 = vld [vmem:[%s364 + $0x68] sm:$0x3]
    %v379 = vld [vmem:[%s364 + $0x70] sm:$0xff]
    %v380 = vld [vmem:[%s364 + $0x78] sm:$0x3]
    %v381 = vld [vmem:[%s364 + $0x80] sm:$0xff]
    %v382 = vld [vmem:[%s364 + $0x88] sm:$0x3]
    %v383 = vld [vmem:[%s364 + $0x90] sm:$0xff]
    %v384 = vld [vmem:[%s364 + $0x98] sm:$0x3]
    %v385 = vlaneseq
    %v386 = vshrl.u32 %v385, 7
    %v387 = vsub.s32 0, %v386
    %v388 = vrot.slane %v362, %v387
    %v389 = vmul.f32 %v388, %v365
    %v390 = vmul.f32 %v388, %v366
    %v391 = vlaneseq
    %v392 = vshrl.u32 %v391, 7
    %v393 = vsub.s32 1, %v392
    %v394 = vrot.slane %v362, %v393
    %v395 = vmul.f32 %v394, %v367
    %v396 = vmul.f32 %v394, %v368
    %v397 = vadd.f32 %v389, %v395
    %v398 = vadd.f32 %v390, %v396
    %v399 = vlaneseq
    %v400 = vshrl.u32 %v399, 7
    %v401 = vsub.s32 2, %v400
    %v402 = vrot.slane %v362, %v401
    %v403 = vmul.f32 %v402, %v369
    %v404 = vmul.f32 %v402, %v370
    %v405 = vadd.f32 %v397, %v403
    %v406 = vadd.f32 %v398, %v404
    %v407 = vlaneseq
    %v408 = vshrl.u32 %v407, 7
    %v409 = vsub.s32 3, %v408
    %v410 = vrot.slane %v362, %v409
    %v411 = vmul.f32 %v410, %v371
    %v412 = vmul.f32 %v410, %v372
    %v413 = vadd.f32 %v405, %v411
    %v414 = vadd.f32 %v406, %v412
    %v415 = vlaneseq
    %v416 = vshrl.u32 %v415, 7
    %v417 = vsub.s32 4, %v416
    %v418 = vrot.slane %v362, %v417
    %v419 = vmul.f32 %v418, %v373
    %v420 = vmul.f32 %v418, %v374
    %v421 = vadd.f32 %v413, %v419
    %v422 = vadd.f32 %v414, %v420
    %v423 = vlaneseq
    %v424 = vshrl.u32 %v423, 7
    %v425 = vsub.s32 5, %v424
    %v426 = vrot.slane %v362, %v425
    %v427 = vmul.f32 %v426, %v375
    %v428 = vmul.f32 %v426, %v376
    %v429 = vadd.f32 %v421, %v427
    %v430 = vadd.f32 %v422, %v428
    %v431 = vlaneseq
    %v432 = vshrl.u32 %v431, 7
    %v433 = vsub.s32 6, %v432
    %v434 = vrot.slane %v362, %v433
    %v435 = vmul.f32 %v434, %v377
    %v436 = vmul.f32 %v434, %v378
    %v437 = vadd.f32 %v429, %v435
    %v438 = vadd.f32 %v430, %v436
    %v439 = vlaneseq
    %v440 = vshrl.u32 %v439, 7
    %v441 = vsub.s32 7, %v440
    %v442 = vrot.slane %v362, %v441
    %v443 = vmul.f32 %v442, %v379
    %v444 = vmul.f32 %v442, %v380
    %v445 = vadd.f32 %v437, %v443
    %v446 = vadd.f32 %v438, %v444
    %v447 = vlaneseq
    %v448 = vshrl.u32 %v447, 7
    %v449 = vsub.s32 0, %v448
    %v450 = vrot.slane %v363, %v449
    %v451 = vmul.f32 %v450, %v381
    %v452 = vmul.f32 %v450, %v382
    %v453 = vadd.f32 %v445, %v451
    %v454 = vadd.f32 %v446, %v452
    %v455 = vlaneseq
    %v456 = vshrl.u32 %v455, 7
    %v457 = vsub.s32 1, %v456
    %v458 = vrot.slane %v363, %v457
    %v459 = vmul.f32 %v458, %v383
    %v460 = vmul.f32 %v458, %v384
    %v461 = vadd.f32 %v453, %v459
    %v462 = vadd.f32 %v454, %v460
    %vm463 = vcmp.ge.f32.partialorder %v461, 0.0
    %vm464 = vcmp.ge.f32.partialorder %v462, 0.0
    %v465 = vsel %vm463, 1.0, -1.0
    %v466 = vsel %vm464, 1.0, -1.0
    %v467 = vand.u32 2147483647, %v461
    %v468 = vand.u32 2147483647, %v462
    %vm469 = vcmp.ge.f32.partialorder %v467, 1e-12
    %vm470 = vcmp.ge.f32.partialorder %v468, 1e-12
    %v471 = vmul.f32 %v461, 1e+12
    %v472 = vmul.f32 %v462, 1e+12
    %v473 = vsel %vm469, %v465, %v471
    %v474 = vsel %vm470, %v466, %v472
    %s475 = scalar_lea.vmem %s0, 640
    %v476 = vld [vmem:[%s475] sm:$0xff]
    %v477 = vld [vmem:[%s475 + $0x8] sm:$0x3]
    %v478 = vld [vmem:[%s475 + $0x10] sm:$0xff]
    %v479 = vld [vmem:[%s475 + $0x18] sm:$0x3]
    %v480 = vld [vmem:[%s475 + $0x20] sm:$0xff]
    %v481 = vld [vmem:[%s475 + $0x28] sm:$0x3]
    %v482 = vld [vmem:[%s475 + $0x30] sm:$0xff]
    %v483 = vld [vmem:[%s475 + $0x38] sm:$0x3]
    %v484 = vld [vmem:[%s475 + $0x40] sm:$0xff]
    %v485 = vld [vmem:[%s475 + $0x48] sm:$0x3]
    %v486 = vld [vmem:[%s475 + $0x50] sm:$0xff]
    %v487 = vld [vmem:[%s475 + $0x58] sm:$0x3]
    %v488 = vld [vmem:[%s475 + $0x60] sm:$0xff]
    %v489 = vld [vmem:[%s475 + $0x68] sm:$0x3]
    %v490 = vld [vmem:[%s475 + $0x70] sm:$0xff]
    %v491 = vld [vmem:[%s475 + $0x78] sm:$0x3]
    %v492 = vld [vmem:[%s475 + $0x80] sm:$0xff]
    %v493 = vld [vmem:[%s475 + $0x88] sm:$0x3]
    %v494 = vld [vmem:[%s475 + $0x90] sm:$0xff]
    %v495 = vld [vmem:[%s475 + $0x98] sm:$0x3]
    %v496 = vlaneseq
    %v497 = vshrl.u32 %v496, 7
    %v498 = vsub.s32 0, %v497
    %v499 = vrot.slane %v473, %v498
    %v500 = vmul.f32 %v499, %v476
    %v501 = vmul.f32 %v499, %v477
    %v502 = vlaneseq
    %v503 = vshrl.u32 %v502, 7
    %v504 = vsub.s32 1, %v503
    %v505 = vrot.slane %v473, %v504
    %v506 = vmul.f32 %v505, %v478
    %v507 = vmul.f32 %v505, %v479
    %v508 = vadd.f32 %v500, %v506
    %v509 = vadd.f32 %v501, %v507
    %v510 = vlaneseq
    %v511 = vshrl.u32 %v510, 7
    %v512 = vsub.s32 2, %v511
    %v513 = vrot.slane %v473, %v512
    %v514 = vmul.f32 %v513, %v480
    %v515 = vmul.f32 %v513, %v481
    %v516 = vadd.f32 %v508, %v514
    %v517 = vadd.f32 %v509, %v515
    %v518 = vlaneseq
    %v519 = vshrl.u32 %v518, 7
    %v520 = vsub.s32 3, %v519
    %v521 = vrot.slane %v473, %v520
    %v522 = vmul.f32 %v521, %v482
    %v523 = vmul.f32 %v521, %v483
    %v524 = vadd.f32 %v516, %v522
    %v525 = vadd.f32 %v517, %v523
    %v526 = vlaneseq
    %v527 = vshrl.u32 %v526, 7
    %v528 = vsub.s32 4, %v527
    %v529 = vrot.slane %v473, %v528
    %v530 = vmul.f32 %v529, %v484
    %v531 = vmul.f32 %v529, %v485
    %v532 = vadd.f32 %v524, %v530
    %v533 = vadd.f32 %v525, %v531
    %v534 = vlaneseq
    %v535 = vshrl.u32 %v534, 7
    %v536 = vsub.s32 5, %v535
    %v537 = vrot.slane %v473, %v536
    %v538 = vmul.f32 %v537, %v486
    %v539 = vmul.f32 %v537, %v487
    %v540 = vadd.f32 %v532, %v538
    %v541 = vadd.f32 %v533, %v539
    %v542 = vlaneseq
    %v543 = vshrl.u32 %v542, 7
    %v544 = vsub.s32 6, %v543
    %v545 = vrot.slane %v473, %v544
    %v546 = vmul.f32 %v545, %v488
    %v547 = vmul.f32 %v545, %v489
    %v548 = vadd.f32 %v540, %v546
    %v549 = vadd.f32 %v541, %v547
    %v550 = vlaneseq
    %v551 = vshrl.u32 %v550, 7
    %v552 = vsub.s32 7, %v551
    %v553 = vrot.slane %v473, %v552
    %v554 = vmul.f32 %v553, %v490
    %v555 = vmul.f32 %v553, %v491
    %v556 = vadd.f32 %v548, %v554
    %v557 = vadd.f32 %v549, %v555
    %v558 = vlaneseq
    %v559 = vshrl.u32 %v558, 7
    %v560 = vsub.s32 0, %v559
    %v561 = vrot.slane %v474, %v560
    %v562 = vmul.f32 %v561, %v492
    %v563 = vmul.f32 %v561, %v493
    %v564 = vadd.f32 %v556, %v562
    %v565 = vadd.f32 %v557, %v563
    %v566 = vlaneseq
    %v567 = vshrl.u32 %v566, 7
    %v568 = vsub.s32 1, %v567
    %v569 = vrot.slane %v474, %v568
    %v570 = vmul.f32 %v569, %v494
    %v571 = vmul.f32 %v569, %v495
    %v572 = vadd.f32 %v564, %v570
    %v573 = vadd.f32 %v565, %v571
    %vm574 = vcmp.ge.f32.partialorder %v572, 0.0
    %vm575 = vcmp.ge.f32.partialorder %v573, 0.0
    %v576 = vsel %vm574, 1.0, -1.0
    %v577 = vsel %vm575, 1.0, -1.0
    %v578 = vand.u32 2147483647, %v572
    %v579 = vand.u32 2147483647, %v573
    %vm580 = vcmp.ge.f32.partialorder %v578, 1e-12
    %vm581 = vcmp.ge.f32.partialorder %v579, 1e-12
    %v582 = vmul.f32 %v572, 1e+12
    %v583 = vmul.f32 %v573, 1e+12
    %v584 = vsel %vm580, %v576, %v582
    %v585 = vsel %vm581, %v577, %v583
    %s586 = scalar_lea.vmem %s0, 800
    %v587 = vld [vmem:[%s586] sm:$0xff]
    %v588 = vld [vmem:[%s586 + $0x8] sm:$0x3]
    %v589 = vld [vmem:[%s586 + $0x10] sm:$0xff]
    %v590 = vld [vmem:[%s586 + $0x18] sm:$0x3]
    %v591 = vld [vmem:[%s586 + $0x20] sm:$0xff]
    %v592 = vld [vmem:[%s586 + $0x28] sm:$0x3]
    %v593 = vld [vmem:[%s586 + $0x30] sm:$0xff]
    %v594 = vld [vmem:[%s586 + $0x38] sm:$0x3]
    %v595 = vld [vmem:[%s586 + $0x40] sm:$0xff]
    %v596 = vld [vmem:[%s586 + $0x48] sm:$0x3]
    %v597 = vld [vmem:[%s586 + $0x50] sm:$0xff]
    %v598 = vld [vmem:[%s586 + $0x58] sm:$0x3]
    %v599 = vld [vmem:[%s586 + $0x60] sm:$0xff]
    %v600 = vld [vmem:[%s586 + $0x68] sm:$0x3]
    %v601 = vld [vmem:[%s586 + $0x70] sm:$0xff]
    %v602 = vld [vmem:[%s586 + $0x78] sm:$0x3]
    %v603 = vld [vmem:[%s586 + $0x80] sm:$0xff]
    %v604 = vld [vmem:[%s586 + $0x88] sm:$0x3]
    %v605 = vld [vmem:[%s586 + $0x90] sm:$0xff]
    %v606 = vld [vmem:[%s586 + $0x98] sm:$0x3]
    %v607 = vlaneseq
    %v608 = vshrl.u32 %v607, 7
    %v609 = vsub.s32 0, %v608
    %v610 = vrot.slane %v584, %v609
    %v611 = vmul.f32 %v610, %v587
    %v612 = vmul.f32 %v610, %v588
    %v613 = vlaneseq
    %v614 = vshrl.u32 %v613, 7
    %v615 = vsub.s32 1, %v614
    %v616 = vrot.slane %v584, %v615
    %v617 = vmul.f32 %v616, %v589
    %v618 = vmul.f32 %v616, %v590
    %v619 = vadd.f32 %v611, %v617
    %v620 = vadd.f32 %v612, %v618
    %v621 = vlaneseq
    %v622 = vshrl.u32 %v621, 7
    %v623 = vsub.s32 2, %v622
    %v624 = vrot.slane %v584, %v623
    %v625 = vmul.f32 %v624, %v591
    %v626 = vmul.f32 %v624, %v592
    %v627 = vadd.f32 %v619, %v625
    %v628 = vadd.f32 %v620, %v626
    %v629 = vlaneseq
    %v630 = vshrl.u32 %v629, 7
    %v631 = vsub.s32 3, %v630
    %v632 = vrot.slane %v584, %v631
    %v633 = vmul.f32 %v632, %v593
    %v634 = vmul.f32 %v632, %v594
    %v635 = vadd.f32 %v627, %v633
    %v636 = vadd.f32 %v628, %v634
    %v637 = vlaneseq
    %v638 = vshrl.u32 %v637, 7
    %v639 = vsub.s32 4, %v638
    %v640 = vrot.slane %v584, %v639
    %v641 = vmul.f32 %v640, %v595
    %v642 = vmul.f32 %v640, %v596
    %v643 = vadd.f32 %v635, %v641
    %v644 = vadd.f32 %v636, %v642
    %v645 = vlaneseq
    %v646 = vshrl.u32 %v645, 7
    %v647 = vsub.s32 5, %v646
    %v648 = vrot.slane %v584, %v647
    %v649 = vmul.f32 %v648, %v597
    %v650 = vmul.f32 %v648, %v598
    %v651 = vadd.f32 %v643, %v649
    %v652 = vadd.f32 %v644, %v650
    %v653 = vlaneseq
    %v654 = vshrl.u32 %v653, 7
    %v655 = vsub.s32 6, %v654
    %v656 = vrot.slane %v584, %v655
    %v657 = vmul.f32 %v656, %v599
    %v658 = vmul.f32 %v656, %v600
    %v659 = vadd.f32 %v651, %v657
    %v660 = vadd.f32 %v652, %v658
    %v661 = vlaneseq
    %v662 = vshrl.u32 %v661, 7
    %v663 = vsub.s32 7, %v662
    %v664 = vrot.slane %v584, %v663
    %v665 = vmul.f32 %v664, %v601
    %v666 = vmul.f32 %v664, %v602
    %v667 = vadd.f32 %v659, %v665
    %v668 = vadd.f32 %v660, %v666
    %v669 = vlaneseq
    %v670 = vshrl.u32 %v669, 7
    %v671 = vsub.s32 0, %v670
    %v672 = vrot.slane %v585, %v671
    %v673 = vmul.f32 %v672, %v603
    %v674 = vmul.f32 %v672, %v604
    %v675 = vadd.f32 %v667, %v673
    %v676 = vadd.f32 %v668, %v674
    %v677 = vlaneseq
    %v678 = vshrl.u32 %v677, 7
    %v679 = vsub.s32 1, %v678
    %v680 = vrot.slane %v585, %v679
    %v681 = vmul.f32 %v680, %v605
    %v682 = vmul.f32 %v680, %v606
    %v683 = vadd.f32 %v675, %v681
    %v684 = vadd.f32 %v676, %v682
    %vm685 = vcmp.ge.f32.partialorder %v683, 0.0
    %vm686 = vcmp.ge.f32.partialorder %v684, 0.0
    %v687 = vsel %vm685, 1.0, -1.0
    %v688 = vsel %vm686, 1.0, -1.0
    %v689 = vand.u32 2147483647, %v683
    %v690 = vand.u32 2147483647, %v684
    %vm691 = vcmp.ge.f32.partialorder %v689, 1e-12
    %vm692 = vcmp.ge.f32.partialorder %v690, 1e-12
    %v693 = vmul.f32 %v683, 1e+12
    %v694 = vmul.f32 %v684, 1e+12
    %v695 = vsel %vm691, %v687, %v693
    %v696 = vsel %vm692, %v688, %v694
    %s697 = scalar_lea.vmem %s0, 960
    %v698 = vld [vmem:[%s697] sm:$0xff]
    %v699 = vld [vmem:[%s697 + $0x8] sm:$0x3]
    %v700 = vld [vmem:[%s697 + $0x10] sm:$0xff]
    %v701 = vld [vmem:[%s697 + $0x18] sm:$0x3]
    %v702 = vld [vmem:[%s697 + $0x20] sm:$0xff]
    %v703 = vld [vmem:[%s697 + $0x28] sm:$0x3]
    %v704 = vld [vmem:[%s697 + $0x30] sm:$0xff]
    %v705 = vld [vmem:[%s697 + $0x38] sm:$0x3]
    %v706 = vld [vmem:[%s697 + $0x40] sm:$0xff]
    %v707 = vld [vmem:[%s697 + $0x48] sm:$0x3]
    %v708 = vld [vmem:[%s697 + $0x50] sm:$0xff]
    %v709 = vld [vmem:[%s697 + $0x58] sm:$0x3]
    %v710 = vld [vmem:[%s697 + $0x60] sm:$0xff]
    %v711 = vld [vmem:[%s697 + $0x68] sm:$0x3]
    %v712 = vld [vmem:[%s697 + $0x70] sm:$0xff]
    %v713 = vld [vmem:[%s697 + $0x78] sm:$0x3]
    %v714 = vld [vmem:[%s697 + $0x80] sm:$0xff]
    %v715 = vld [vmem:[%s697 + $0x88] sm:$0x3]
    %v716 = vld [vmem:[%s697 + $0x90] sm:$0xff]
    %v717 = vld [vmem:[%s697 + $0x98] sm:$0x3]
    %v718 = vlaneseq
    %v719 = vshrl.u32 %v718, 7
    %v720 = vsub.s32 0, %v719
    %v721 = vrot.slane %v695, %v720
    %v722 = vmul.f32 %v721, %v698
    %v723 = vmul.f32 %v721, %v699
    %v724 = vlaneseq
    %v725 = vshrl.u32 %v724, 7
    %v726 = vsub.s32 1, %v725
    %v727 = vrot.slane %v695, %v726
    %v728 = vmul.f32 %v727, %v700
    %v729 = vmul.f32 %v727, %v701
    %v730 = vadd.f32 %v722, %v728
    %v731 = vadd.f32 %v723, %v729
    %v732 = vlaneseq
    %v733 = vshrl.u32 %v732, 7
    %v734 = vsub.s32 2, %v733
    %v735 = vrot.slane %v695, %v734
    %v736 = vmul.f32 %v735, %v702
    %v737 = vmul.f32 %v735, %v703
    %v738 = vadd.f32 %v730, %v736
    %v739 = vadd.f32 %v731, %v737
    %v740 = vlaneseq
    %v741 = vshrl.u32 %v740, 7
    %v742 = vsub.s32 3, %v741
    %v743 = vrot.slane %v695, %v742
    %v744 = vmul.f32 %v743, %v704
    %v745 = vmul.f32 %v743, %v705
    %v746 = vadd.f32 %v738, %v744
    %v747 = vadd.f32 %v739, %v745
    %v748 = vlaneseq
    %v749 = vshrl.u32 %v748, 7
    %v750 = vsub.s32 4, %v749
    %v751 = vrot.slane %v695, %v750
    %v752 = vmul.f32 %v751, %v706
    %v753 = vmul.f32 %v751, %v707
    %v754 = vadd.f32 %v746, %v752
    %v755 = vadd.f32 %v747, %v753
    %v756 = vlaneseq
    %v757 = vshrl.u32 %v756, 7
    %v758 = vsub.s32 5, %v757
    %v759 = vrot.slane %v695, %v758
    %v760 = vmul.f32 %v759, %v708
    %v761 = vmul.f32 %v759, %v709
    %v762 = vadd.f32 %v754, %v760
    %v763 = vadd.f32 %v755, %v761
    %v764 = vlaneseq
    %v765 = vshrl.u32 %v764, 7
    %v766 = vsub.s32 6, %v765
    %v767 = vrot.slane %v695, %v766
    %v768 = vmul.f32 %v767, %v710
    %v769 = vmul.f32 %v767, %v711
    %v770 = vadd.f32 %v762, %v768
    %v771 = vadd.f32 %v763, %v769
    %v772 = vlaneseq
    %v773 = vshrl.u32 %v772, 7
    %v774 = vsub.s32 7, %v773
    %v775 = vrot.slane %v695, %v774
    %v776 = vmul.f32 %v775, %v712
    %v777 = vmul.f32 %v775, %v713
    %v778 = vadd.f32 %v770, %v776
    %v779 = vadd.f32 %v771, %v777
    %v780 = vlaneseq
    %v781 = vshrl.u32 %v780, 7
    %v782 = vsub.s32 0, %v781
    %v783 = vrot.slane %v696, %v782
    %v784 = vmul.f32 %v783, %v714
    %v785 = vmul.f32 %v783, %v715
    %v786 = vadd.f32 %v778, %v784
    %v787 = vadd.f32 %v779, %v785
    %v788 = vlaneseq
    %v789 = vshrl.u32 %v788, 7
    %v790 = vsub.s32 1, %v789
    %v791 = vrot.slane %v696, %v790
    %v792 = vmul.f32 %v791, %v716
    %v793 = vmul.f32 %v791, %v717
    %v794 = vadd.f32 %v786, %v792
    %v795 = vadd.f32 %v787, %v793
    %vm796 = vcmp.ge.f32.partialorder %v794, 0.0
    %vm797 = vcmp.ge.f32.partialorder %v795, 0.0
    %v798 = vsel %vm796, 1.0, -1.0
    %v799 = vsel %vm797, 1.0, -1.0
    %v800 = vand.u32 2147483647, %v794
    %v801 = vand.u32 2147483647, %v795
    %vm802 = vcmp.ge.f32.partialorder %v800, 1e-12
    %vm803 = vcmp.ge.f32.partialorder %v801, 1e-12
    %v804 = vmul.f32 %v794, 1e+12
    %v805 = vmul.f32 %v795, 1e+12
    %v806 = vsel %vm802, %v798, %v804
    %v807 = vsel %vm803, %v799, %v805
    %s808 = scalar_lea.vmem %s0, 1120
    %v809 = vld [vmem:[%s808] sm:$0xff]
    %v810 = vld [vmem:[%s808 + $0x8] sm:$0x3]
    %v811 = vld [vmem:[%s808 + $0x10] sm:$0xff]
    %v812 = vld [vmem:[%s808 + $0x18] sm:$0x3]
    %v813 = vld [vmem:[%s808 + $0x20] sm:$0xff]
    %v814 = vld [vmem:[%s808 + $0x28] sm:$0x3]
    %v815 = vld [vmem:[%s808 + $0x30] sm:$0xff]
    %v816 = vld [vmem:[%s808 + $0x38] sm:$0x3]
    %v817 = vld [vmem:[%s808 + $0x40] sm:$0xff]
    %v818 = vld [vmem:[%s808 + $0x48] sm:$0x3]
    %v819 = vld [vmem:[%s808 + $0x50] sm:$0xff]
    %v820 = vld [vmem:[%s808 + $0x58] sm:$0x3]
    %v821 = vld [vmem:[%s808 + $0x60] sm:$0xff]
    %v822 = vld [vmem:[%s808 + $0x68] sm:$0x3]
    %v823 = vld [vmem:[%s808 + $0x70] sm:$0xff]
    %v824 = vld [vmem:[%s808 + $0x78] sm:$0x3]
    %v825 = vld [vmem:[%s808 + $0x80] sm:$0xff]
    %v826 = vld [vmem:[%s808 + $0x88] sm:$0x3]
    %v827 = vld [vmem:[%s808 + $0x90] sm:$0xff]
    %v828 = vld [vmem:[%s808 + $0x98] sm:$0x3]
    %v829 = vlaneseq
    %v830 = vshrl.u32 %v829, 7
    %v831 = vsub.s32 0, %v830
    %v832 = vrot.slane %v806, %v831
    %v833 = vmul.f32 %v832, %v809
    %v834 = vmul.f32 %v832, %v810
    %v835 = vlaneseq
    %v836 = vshrl.u32 %v835, 7
    %v837 = vsub.s32 1, %v836
    %v838 = vrot.slane %v806, %v837
    %v839 = vmul.f32 %v838, %v811
    %v840 = vmul.f32 %v838, %v812
    %v841 = vadd.f32 %v833, %v839
    %v842 = vadd.f32 %v834, %v840
    %v843 = vlaneseq
    %v844 = vshrl.u32 %v843, 7
    %v845 = vsub.s32 2, %v844
    %v846 = vrot.slane %v806, %v845
    %v847 = vmul.f32 %v846, %v813
    %v848 = vmul.f32 %v846, %v814
    %v849 = vadd.f32 %v841, %v847
    %v850 = vadd.f32 %v842, %v848
    %v851 = vlaneseq
    %v852 = vshrl.u32 %v851, 7
    %v853 = vsub.s32 3, %v852
    %v854 = vrot.slane %v806, %v853
    %v855 = vmul.f32 %v854, %v815
    %v856 = vmul.f32 %v854, %v816
    %v857 = vadd.f32 %v849, %v855
    %v858 = vadd.f32 %v850, %v856
    %v859 = vlaneseq
    %v860 = vshrl.u32 %v859, 7
    %v861 = vsub.s32 4, %v860
    %v862 = vrot.slane %v806, %v861
    %v863 = vmul.f32 %v862, %v817
    %v864 = vmul.f32 %v862, %v818
    %v865 = vadd.f32 %v857, %v863
    %v866 = vadd.f32 %v858, %v864
    %v867 = vlaneseq
    %v868 = vshrl.u32 %v867, 7
    %v869 = vsub.s32 5, %v868
    %v870 = vrot.slane %v806, %v869
    %v871 = vmul.f32 %v870, %v819
    %v872 = vmul.f32 %v870, %v820
    %v873 = vadd.f32 %v865, %v871
    %v874 = vadd.f32 %v866, %v872
    %v875 = vlaneseq
    %v876 = vshrl.u32 %v875, 7
    %v877 = vsub.s32 6, %v876
    %v878 = vrot.slane %v806, %v877
    %v879 = vmul.f32 %v878, %v821
    %v880 = vmul.f32 %v878, %v822
    %v881 = vadd.f32 %v873, %v879
    %v882 = vadd.f32 %v874, %v880
    %v883 = vlaneseq
    %v884 = vshrl.u32 %v883, 7
    %v885 = vsub.s32 7, %v884
    %v886 = vrot.slane %v806, %v885
    %v887 = vmul.f32 %v886, %v823
    %v888 = vmul.f32 %v886, %v824
    %v889 = vadd.f32 %v881, %v887
    %v890 = vadd.f32 %v882, %v888
    %v891 = vlaneseq
    %v892 = vshrl.u32 %v891, 7
    %v893 = vsub.s32 0, %v892
    %v894 = vrot.slane %v807, %v893
    %v895 = vmul.f32 %v894, %v825
    %v896 = vmul.f32 %v894, %v826
    %v897 = vadd.f32 %v889, %v895
    %v898 = vadd.f32 %v890, %v896
    %v899 = vlaneseq
    %v900 = vshrl.u32 %v899, 7
    %v901 = vsub.s32 1, %v900
    %v902 = vrot.slane %v807, %v901
    %v903 = vmul.f32 %v902, %v827
    %v904 = vmul.f32 %v902, %v828
    %v905 = vadd.f32 %v897, %v903
    %v906 = vadd.f32 %v898, %v904
    %vm907 = vcmp.ge.f32.partialorder %v905, 0.0
    %vm908 = vcmp.ge.f32.partialorder %v906, 0.0
    %v909 = vsel %vm907, 1.0, -1.0
    %v910 = vsel %vm908, 1.0, -1.0
    %v911 = vand.u32 2147483647, %v905
    %v912 = vand.u32 2147483647, %v906
    %vm913 = vcmp.ge.f32.partialorder %v911, 1e-12
    %vm914 = vcmp.ge.f32.partialorder %v912, 1e-12
    %v915 = vmul.f32 %v905, 1e+12
    %v916 = vmul.f32 %v906, 1e+12
    %v917 = vsel %vm913, %v909, %v915
    %v918 = vsel %vm914, %v910, %v916
    %vm919 = vcmask 15360
    %920 = vst.msk [vmem:[#allocation2] sm:$0xff] %vm919, %v917
    %vm921 = vcmask 9216
    %922 = vst.msk [vmem:[#allocation2 + $0x8] sm:$0x3] %vm921, %v918
    // Predicated region
    $region22: #{tn_forward.1} parent=1 // pred_check
      %p923 = pneg %p20
    $region23: #{tn_forward.1} parent=1 // pred_check_branch
      %925 = sbr.rel (%p923) target = $region25
    $region24: #{tn_forward.1} parent=1 // pred_region
      %v926 = vld [vmem:[%s2] sm:$0xff]
      %v927 = vld [vmem:[%s2 + $0x8] sm:$0x3]
      %929 = vset.pattern.permute.xlu0 0
      %930 = vperm.xlu0 %929, %v926
      %v931 = vpop.permute.xlu0 %930
      %934 = vset.pattern.permute.xlu0 0
      %935 = vperm.xlu0 %934, %v927
      %v936 = vpop.permute.xlu0 %935
      %v938 = vmul.f32 %v917, %v931
      %v939 = vmul.f32 %v918, %v936
      %v940 = vsel %vm919, %v938, 0.0
      %v941 = vsel %vm921, %v939, 0.0
      %v942 = vadd.f32 %v940, %v941
      %v943 = vrot.slane %v942, 4
      %v944 = vadd.f32 %v942, %v943
      %v945 = vrot.slane %v944, 2
      %v946 = vadd.f32 %v944, %v945
      %v947 = vrot.slane %v946, 1
      %v948 = vadd.f32 %v946, %v947
      %v949 = vld [vmem:[#allocation3] sm:$0x1]
      %951 = vset.pattern.permute.xlu0 0
      %952 = vperm.xlu0 %951, %v949
      %v953 = vpop.permute.xlu0 %952
      %v955 = vlaneseq
      %v956 = vshrl.u32 %v955, 7
      %v957 = vsub.s32 0, %v956
      %v958 = vrot.slane %v953, %v957
      %v959 = vadd.f32 %v948, %v958
      %vm960 = vcmask 8192
      %961 = vst.msk [vmem:[#allocation4] sm:$0x1] %vm960, %v959
    $region25: #{tn_forward.1} parent=1 // pred_fallthru
      _
    // Predicated region
    $region26: #{tn_forward.1} parent=1 // pred_check
      _
    $region27: #{tn_forward.1} parent=1 // pred_check_branch
      %963 = sbr.rel (0) target = $region29
    $region28: #{tn_forward.1} parent=1 // pred_region
      %s965 = ssub.s32 16, 16
      %966 = vsyncadd [#allocation5], %s965
      %s968 = sshll.u32 [#allocation4], 4
      %s969 = int_to_ptr.vmem [resolvable:$true] %s968
      %971 = dma.vmem_to_hbm [thread:$0]  %s969, 16, %s4, [#allocation5]
    $region29: #{tn_forward.1} parent=1 // pred_fallthru
      _
    // Predicated region
    $region30: #{tn_forward.1} parent=1 // pred_check
      _
    $region31: #{tn_forward.1} parent=1 // pred_check_branch
      %973 = sbr.rel (0) target = $region33
    $region32: #{tn_forward.1} parent=1 // pred_region
      %974 = dma.done [#allocation5], 16
    $region33: #{tn_forward.1} parent=1 // pred_fallthru
      _
    %975 = vsyncpa [#allocation5], 1

</llo_original>
